<compile_context>
chip_gen: v6e
topology: v6e:2x2x1
jax: 0.10.0
libtpu: 0.0.40
codegen_flags: <defaults>
</compile_context>

<pallas_src>
import functools

import jax
import jax.numpy as jnp
from jax import lax
from jax.experimental import pallas as pl
from jax.experimental.pallas import tpu as pltpu


def fused_mha_kernel(x_ref, wqkv_ref, wp_ref, bp_ref, o_ref, attn_scratch, *,
                     num_heads, head_dim):
    # x_ref: (1, T, C) f32
    # wqkv_ref: (C, 3C) bf16  (Q columns pre-scaled by Dh**-0.5)
    # wp_ref: (C, C) bf16, bp_ref: (1, C) f32
    # o_ref: (1, T, C) f32
    # attn_scratch: (T, C) bf16 VMEM — lane-dense concat of per-head outputs
    x = x_ref[0]
    T, C = x.shape

    # One wide, lane-dense QKV matmul on the MXU (bf16 inputs, f32 accumulate),
    # then a single cast to bf16 shared by every head's q/k/v slice.
    qkv = jnp.dot(x.astype(jnp.bfloat16), wqkv_ref[...],
                  preferred_element_type=jnp.float32)            # (T, 3C) f32
    qkv_b = qkv.astype(jnp.bfloat16)                             # single cast

    # Causal mask built once per grid step and reused by every head.
    row = lax.broadcasted_iota(jnp.int32, (T, T), 0)
    col = lax.broadcasted_iota(jnp.int32, (T, T), 1)
    causal = col <= row

    # NOTE: per-head matmuls contract / produce Dh-wide operands; with Dh < 128
    # the MXU runs below peak (worse on v6e/v7x's 256-wide arrays) — acceptable
    # at Dh=48 (spec) since the softmax/EUP work dominates per (T,T) element.
    for h in range(num_heads):
        lo = h * head_dim
        q = qkv_b[:, lo:lo + head_dim]                 # scale folded into weights
        k = qkv_b[:, C + lo:C + lo + head_dim]
        v = qkv_b[:, 2 * C + lo:2 * C + lo + head_dim]

        # scores = q @ k^T (contract head_dim of both; no explicit transpose)
        s = lax.dot_general(q, k, (((1,), (1,)), ((), ())),
                            preferred_element_type=jnp.float32)  # (T, T) f32
        s = jnp.where(causal, s, -jnp.inf)

        # Numerically stable f32 softmax; EUP reciprocal instead of a (T,T)
        # VALU divide.  Diagonal is always unmasked -> m finite, l >= 1.
        m = jnp.max(s, axis=-1, keepdims=True)
        e = jnp.exp(s - m)
        l = jnp.sum(e, axis=-1, keepdims=True)
        p = e * pl.reciprocal(l, approx=True)

        # TODO(synk): attention dropout (p=0.1) omitted — eval/inference semantics.
        head_out = jnp.dot(p.astype(jnp.bfloat16), v,
                           preferred_element_type=jnp.float32)   # (T, Dh) f32
        # Write straight into the lane-dense concat slab (no list/concatenate).
        attn_scratch[:, lo:lo + head_dim] = head_out.astype(jnp.bfloat16)

    # Fused output projection (single K=C-dense matmul) + bias.
    proj = jnp.dot(attn_scratch[...], wp_ref[...],
                   preferred_element_type=jnp.float32)           # (T, C) f32
    # TODO(synk): output dropout (p=0.1) omitted — eval/inference semantics.
    o_ref[0] = (proj + bp_ref[...]).astype(o_ref.dtype)


def _vmem_limit_bytes(T, C, single_buffer_weights):
    """Raise the scoped VMEM limit only if the full-T tiles need more than the
    32 MiB default; cap per-generation below physical VMEM (v7x: 64 MiB)."""
    f32, bf16 = 4, 2
    wbuf = 1 if single_buffer_weights else 2
    pipelined = 2 * T * C * f32              # x (double-buffered)
    pipelined += 2 * T * C * f32             # out
    pipelined += wbuf * C * 3 * C * bf16     # wqkv
    pipelined += wbuf * C * C * bf16         # wp
    pipelined += wbuf * C * f32              # bias
    live = T * 3 * C * (f32 + bf16)          # qkv (f32) + bf16 copy
    live += 4 * T * T * f32                  # mask + score/exp/prob tiles
    live += T * C * bf16                     # head-output concat scratch
    live += T * C * f32                      # projection accumulator
    est = int((pipelined + live) * 1.5)      # headroom for compiler temporaries
    default_limit = 32 * 1024 * 1024
    if est <= default_limit:
        return None
    try:
        # ~85% of physical VMEM: ≈54 MiB on v7x, ≈108 MiB on v5e/v6e.
        cap = int(pltpu.get_tpu_info().vmem_capacity_bytes * 0.85)
    except Exception:
        cap = 56 * 1024 * 1024
    return min(est, cap)


def multi_head_attention(x, wq, wk, wv, wp_t, bp):
    """x: (B, T, C); wq/wk/wv: (H, C, Dh) per-head weights (in, out) layout;
    wp_t: (C, C) pre-transposed projection weight; bp: (1, C) bias."""
    B, T, C = x.shape
    H, _, Dh = wq.shape
    assert H * Dh == C

    # Trace-time weight prep (free at runtime):
    #   per-head (H, C, Dh) -> all-heads (C, C), head h at columns [h*Dh, (h+1)*Dh)
    #   fold the Dh**-0.5 attention scale into the Q weights
    #   stack Q|K|V into a single (C, 3C) slab; cast weights to bf16.
    scale = float(Dh) ** -0.5
    to_all_heads = lambda w: jnp.transpose(w, (1, 0, 2)).reshape(C, C)
    wqkv = jnp.concatenate(
        [to_all_heads(wq) * scale, to_all_heads(wk), to_all_heads(wv)],
        axis=-1).astype(jnp.bfloat16)
    wp_b = wp_t.astype(jnp.bfloat16)

    kernel = functools.partial(fused_mha_kernel, num_heads=H, head_dim=Dh)

    flops_per_batch = (2 * T * C * (3 * C)            # QKV projection
                       + H * 2 * (2 * T * T * Dh)     # scores + PV per head
                       + 2 * T * C * C)               # output projection
    cost = pl.CostEstimate(
        flops=B * flops_per_batch,
        transcendentals=B * H * T * T,                # softmax exp
        bytes_accessed=(B * T * C * 4                 # x
                        + C * 3 * C * 2 + C * C * 2   # wqkv, wp (bf16)
                        + C * 4                       # bias
                        + B * T * C * 4))             # out

    def build(single_buffer_weights):
        weight_mode = ({"pipeline_mode": pl.Buffered(1)}
                       if single_buffer_weights else {})
        in_specs = [
            pl.BlockSpec((1, T, C), lambda b: (b, 0, 0)),
            pl.BlockSpec((C, 3 * C), lambda b: (0, 0), **weight_mode),
            pl.BlockSpec((C, C), lambda b: (0, 0), **weight_mode),
            pl.BlockSpec((1, C), lambda b: (0, 0), **weight_mode),
        ]
        return pl.pallas_call(
            kernel,
            out_shape=jax.ShapeDtypeStruct((B, T, C), jnp.float32),
            grid_spec=pltpu.PrefetchScalarGridSpec(
                num_scalar_prefetch=0,
                grid=(B,),
                in_specs=in_specs,
                out_specs=pl.BlockSpec((1, T, C), lambda b: (b, 0, 0)),
                scratch_shapes=[pltpu.VMEM((T, C), jnp.bfloat16)],
            ),
            compiler_params=pltpu.CompilerParams(
                dimension_semantics=("parallel",),
                vmem_limit_bytes=_vmem_limit_bytes(T, C, single_buffer_weights)),
            cost_estimate=cost,
        )

    try:
        # Preferred: constant weights held in a single VMEM buffer.
        return jax.block_until_ready(build(True)(x, wqkv, wp_b, bp))
    except Exception:
        # TODO(synk): fallback if pipeline_mode=pl.Buffered(1) is unsupported
        # on this jax build — only costs the extra weight double-buffer.
        return build(False)(x, wqkv, wp_b, bp)


def reference(x, wq, wk, wv, wp_t, bp):
    """Pure-JAX f32 reference matching the PyTorch forward (eval mode)."""
    B, T, C = x.shape
    H, _, Dh = wq.shape
    q = jnp.einsum('btc,hcd->bhtd', x, wq)
    k = jnp.einsum('btc,hcd->bhtd', x, wk)
    v = jnp.einsum('btc,hcd->bhtd', x, wv)
    s = jnp.einsum('bhtd,bhsd->bhts', q, k) * (Dh ** -0.5)
    mask = jnp.tril(jnp.ones((T, T), dtype=bool))
    s = jnp.where(mask, s, -jnp.inf)
    p = jax.nn.softmax(s, axis=-1)
    o = jnp.einsum('bhts,bhsd->bhtd', p, v)
    concat = jnp.transpose(o, (0, 2, 1, 3)).reshape(B, T, C)
    return concat @ wp_t + bp


if __name__ == "__main__":
    # Small shapes consistent with the module: head_count * head_size == emb dim.
    B, T = 2, 8
    H, Dh = 4, 8
    C = H * Dh            # embedding_dimension_count (scaled down: 32)

    key = jax.random.PRNGKey(0)
    kx, kq, kk, kv, kp, kb = jax.random.split(key, 6)

    x = jax.random.normal(kx, (B, T, C), dtype=jnp.float32)
    # weights pre-transposed to (in, out) layout
    wq = jax.random.normal(kq, (H, C, Dh), dtype=jnp.float32) * 0.1
    wk = jax.random.normal(kk, (H, C, Dh), dtype=jnp.float32) * 0.1
    wv = jax.random.normal(kv, (H, C, Dh), dtype=jnp.float32) * 0.1
    wp_t = jax.random.normal(kp, (C, C), dtype=jnp.float32) * 0.1
    bp = jax.random.normal(kb, (1, C), dtype=jnp.float32) * 0.1

    out = multi_head_attention(x, wq, wk, wv, wp_t, bp)
    out = jax.block_until_ready(out)

    ref = reference(x, wq, wk, wv, wp_t, bp)
    assert out.shape == (B, T, C)
    # Tolerance accounts for bf16 matmul inputs/concat slab + approx reciprocal
    # in the kernel vs. the pure-f32 reference.
    assert jnp.allclose(out, ref, atol=5e-2, rtol=5e-2), "mismatch vs reference"

    print("KERNEL_OK")
</pallas_src>

<mosaic_0001>
module attributes {stable_mosaic.version = 11 : i64} {
  func.func @fused_mha_kernel(%arg0: i32, %arg1: memref<1x8x32xf32, #tpu.memory_space<vmem>>, %arg2: memref<32x96xbf16, #tpu.memory_space<vmem>>, %arg3: memref<32x32xbf16, #tpu.memory_space<vmem>>, %arg4: memref<1x32xf32, #tpu.memory_space<vmem>>, %arg5: memref<1x8x32xf32, #tpu.memory_space<vmem>>, %arg6: memref<8x32xbf16, #tpu.memory_space<vmem>>) attributes {dimension_semantics = [#tpu.dimension_semantics<parallel>], iteration_bounds = array<i64: 2>, scalar_prefetch = 0 : i64, scratch_operands = 1 : i64, tpu.core_type = #tpu.core_type<tc>, window_params = [{transform_indices = @transform_0, window_bounds = array<i64: 1, 8, 32>}, {pipeline_mode = #tpu.pipeline_mode<synchronous>, transform_indices = @transform_1, window_bounds = array<i64: 32, 96>}, {pipeline_mode = #tpu.pipeline_mode<synchronous>, transform_indices = @transform_2, window_bounds = array<i64: 32, 32>}, {pipeline_mode = #tpu.pipeline_mode<synchronous>, transform_indices = @transform_3, window_bounds = array<i64: 1, 32>}, {transform_indices = @transform_4, window_bounds = array<i64: 1, 8, 32>}]} {
    %c0 = arith.constant 0 : index
    %c0_0 = arith.constant 0 : index
    %c0_1 = arith.constant 0 : index
    %0 = vector.load %arg1[%c0, %c0_0, %c0_1] : memref<1x8x32xf32, #tpu.memory_space<vmem>>, vector<1x8x32xf32>
    %1 = vector.shape_cast %0 : vector<1x8x32xf32> to vector<8x32xf32>
    %2 = arith.truncf %1 : vector<8x32xf32> to vector<8x32xbf16>
    %c0_2 = arith.constant 0 : index
    %c0_3 = arith.constant 0 : index
    %3 = vector.load %arg2[%c0_2, %c0_3] : memref<32x96xbf16, #tpu.memory_space<vmem>>, vector<32x96xbf16>
    %cst = arith.constant dense<0.000000e+00> : vector<8x96xf32>
    %4 = tpu.matmul %2, %3, %cst {dimension_numbers = #tpu.dot_dimension_numbers<[1], [0], [0], [1], [0, 0, 1, 1], [], []>} : vector<8x32xbf16>, vector<32x96xbf16>, vector<8x96xf32> -> vector<8x96xf32>
    %5 = arith.truncf %4 : vector<8x96xf32> to vector<8x96xbf16>
    %6 = tpu.iota {dimensions = array<i32: 0>} : vector<8x8xi32>
    %7 = tpu.iota {dimensions = array<i32: 1>} : vector<8x8xi32>
    %8 = arith.cmpi sle, %7, %6 : vector<8x8xi32>
    %9 = vector.extract_strided_slice %5 {offsets = [0, 0], sizes = [8, 8], strides = [1, 1]} : vector<8x96xbf16> to vector<8x8xbf16>
    %10 = vector.extract_strided_slice %5 {offsets = [0, 32], sizes = [8, 8], strides = [1, 1]} : vector<8x96xbf16> to vector<8x8xbf16>
    %11 = vector.extract_strided_slice %5 {offsets = [0, 64], sizes = [8, 8], strides = [1, 1]} : vector<8x96xbf16> to vector<8x8xbf16>
    %cst_4 = arith.constant dense<0.000000e+00> : vector<8x8xf32>
    %12 = tpu.matmul %9, %10, %cst_4 {dimension_numbers = #tpu.dot_dimension_numbers<[1], [1], [0], [0], [0, 0, 1, 0], [], []>} : vector<8x8xbf16>, vector<8x8xbf16>, vector<8x8xf32> -> vector<8x8xf32>
    %cst_5 = arith.constant 0xFF800000 : f32
    %13 = vector.broadcast %cst_5 : f32 to vector<8x8xf32>
    %14 = arith.select %8, %12, %13 : vector<8x8xi1>, vector<8x8xf32>
    %cst_6 = arith.constant dense<0xFF800000> : vector<8xf32>
    %15 = vector.multi_reduction <maximumf>, %14, %cst_6 [1] : vector<8x8xf32> to vector<8xf32>
    %16 = vector.shape_cast %15 : vector<8xf32> to vector<8x1xf32>
    %17 = vector.broadcast %16 : vector<8x1xf32> to vector<8x8xf32>
    %18 = arith.subf %14, %17 : vector<8x8xf32>
    %19 = math.exp %18 : vector<8x8xf32>
    %cst_7 = arith.constant dense<0.000000e+00> : vector<8xf32>
    %20 = vector.multi_reduction <add>, %19, %cst_7 [1] : vector<8x8xf32> to vector<8xf32>
    %21 = vector.shape_cast %20 : vector<8xf32> to vector<8x1xf32>
    %22 = tpu.reciprocal %21 {approx = true} : vector<8x1xf32> -> vector<8x1xf32>
    %23 = vector.broadcast %22 : vector<8x1xf32> to vector<8x8xf32>
    %24 = arith.mulf %19, %23 : vector<8x8xf32>
    %25 = arith.truncf %24 : vector<8x8xf32> to vector<8x8xbf16>
    %cst_8 = arith.constant dense<0.000000e+00> : vector<8x8xf32>
    %26 = tpu.matmul %25, %11, %cst_8 {dimension_numbers = #tpu.dot_dimension_numbers<[1], [0], [0], [1], [0, 0, 1, 1], [], []>} : vector<8x8xbf16>, vector<8x8xbf16>, vector<8x8xf32> -> vector<8x8xf32>
    %27 = arith.truncf %26 : vector<8x8xf32> to vector<8x8xbf16>
    %c0_9 = arith.constant 0 : index
    %c0_10 = arith.constant 0 : index
    %28 = vector.load %arg6[%c0_9, %c0_10] : memref<8x32xbf16, #tpu.memory_space<vmem>>, vector<8x8xbf16>
    tpu.vector_store %arg6[%c0_9, %c0_10], %27 {strides = array<i32>} : memref<8x32xbf16, #tpu.memory_space<vmem>>, vector<8x8xbf16>,
    %29 = vector.extract_strided_slice %5 {offsets = [0, 8], sizes = [8, 8], strides = [1, 1]} : vector<8x96xbf16> to vector<8x8xbf16>
    %30 = vector.extract_strided_slice %5 {offsets = [0, 40], sizes = [8, 8], strides = [1, 1]} : vector<8x96xbf16> to vector<8x8xbf16>
    %31 = vector.extract_strided_slice %5 {offsets = [0, 72], sizes = [8, 8], strides = [1, 1]} : vector<8x96xbf16> to vector<8x8xbf16>
    %cst_11 = arith.constant dense<0.000000e+00> : vector<8x8xf32>
    %32 = tpu.matmul %29, %30, %cst_11 {dimension_numbers = #tpu.dot_dimension_numbers<[1], [1], [0], [0], [0, 0, 1, 0], [], []>} : vector<8x8xbf16>, vector<8x8xbf16>, vector<8x8xf32> -> vector<8x8xf32>
    %cst_12 = arith.constant 0xFF800000 : f32
    %33 = vector.broadcast %cst_12 : f32 to vector<8x8xf32>
    %34 = arith.select %8, %32, %33 : vector<8x8xi1>, vector<8x8xf32>
    %cst_13 = arith.constant dense<0xFF800000> : vector<8xf32>
    %35 = vector.multi_reduction <maximumf>, %34, %cst_13 [1] : vector<8x8xf32> to vector<8xf32>
    %36 = vector.shape_cast %35 : vector<8xf32> to vector<8x1xf32>
    %37 = vector.broadcast %36 : vector<8x1xf32> to vector<8x8xf32>
    %38 = arith.subf %34, %37 : vector<8x8xf32>
    %39 = math.exp %38 : vector<8x8xf32>
    %cst_14 = arith.constant dense<0.000000e+00> : vector<8xf32>
    %40 = vector.multi_reduction <add>, %39, %cst_14 [1] : vector<8x8xf32> to vector<8xf32>
    %41 = vector.shape_cast %40 : vector<8xf32> to vector<8x1xf32>
    %42 = tpu.reciprocal %41 {approx = true} : vector<8x1xf32> -> vector<8x1xf32>
    %43 = vector.broadcast %42 : vector<8x1xf32> to vector<8x8xf32>
    %44 = arith.mulf %39, %43 : vector<8x8xf32>
    %45 = arith.truncf %44 : vector<8x8xf32> to vector<8x8xbf16>
    %cst_15 = arith.constant dense<0.000000e+00> : vector<8x8xf32>
    %46 = tpu.matmul %45, %31, %cst_15 {dimension_numbers = #tpu.dot_dimension_numbers<[1], [0], [0], [1], [0, 0, 1, 1], [], []>} : vector<8x8xbf16>, vector<8x8xbf16>, vector<8x8xf32> -> vector<8x8xf32>
    %47 = arith.truncf %46 : vector<8x8xf32> to vector<8x8xbf16>
    %c0_16 = arith.constant 0 : index
    %c8 = arith.constant 8 : index
    %48 = vector.load %arg6[%c0_16, %c8] : memref<8x32xbf16, #tpu.memory_space<vmem>>, vector<8x8xbf16>
    tpu.vector_store %arg6[%c0_16, %c8], %47 {strides = array<i32>} : memref<8x32xbf16, #tpu.memory_space<vmem>>, vector<8x8xbf16>,
    %49 = vector.extract_strided_slice %5 {offsets = [0, 16], sizes = [8, 8], strides = [1, 1]} : vector<8x96xbf16> to vector<8x8xbf16>
    %50 = vector.extract_strided_slice %5 {offsets = [0, 48], sizes = [8, 8], strides = [1, 1]} : vector<8x96xbf16> to vector<8x8xbf16>
    %51 = vector.extract_strided_slice %5 {offsets = [0, 80], sizes = [8, 8], strides = [1, 1]} : vector<8x96xbf16> to vector<8x8xbf16>
    %cst_17 = arith.constant dense<0.000000e+00> : vector<8x8xf32>
    %52 = tpu.matmul %49, %50, %cst_17 {dimension_numbers = #tpu.dot_dimension_numbers<[1], [1], [0], [0], [0, 0, 1, 0], [], []>} : vector<8x8xbf16>, vector<8x8xbf16>, vector<8x8xf32> -> vector<8x8xf32>
    %cst_18 = arith.constant 0xFF800000 : f32
    %53 = vector.broadcast %cst_18 : f32 to vector<8x8xf32>
    %54 = arith.select %8, %52, %53 : vector<8x8xi1>, vector<8x8xf32>
    %cst_19 = arith.constant dense<0xFF800000> : vector<8xf32>
    %55 = vector.multi_reduction <maximumf>, %54, %cst_19 [1] : vector<8x8xf32> to vector<8xf32>
    %56 = vector.shape_cast %55 : vector<8xf32> to vector<8x1xf32>
    %57 = vector.broadcast %56 : vector<8x1xf32> to vector<8x8xf32>
    %58 = arith.subf %54, %57 : vector<8x8xf32>
    %59 = math.exp %58 : vector<8x8xf32>
    %cst_20 = arith.constant dense<0.000000e+00> : vector<8xf32>
    %60 = vector.multi_reduction <add>, %59, %cst_20 [1] : vector<8x8xf32> to vector<8xf32>
    %61 = vector.shape_cast %60 : vector<8xf32> to vector<8x1xf32>
    %62 = tpu.reciprocal %61 {approx = true} : vector<8x1xf32> -> vector<8x1xf32>
    %63 = vector.broadcast %62 : vector<8x1xf32> to vector<8x8xf32>
    %64 = arith.mulf %59, %63 : vector<8x8xf32>
    %65 = arith.truncf %64 : vector<8x8xf32> to vector<8x8xbf16>
    %cst_21 = arith.constant dense<0.000000e+00> : vector<8x8xf32>
    %66 = tpu.matmul %65, %51, %cst_21 {dimension_numbers = #tpu.dot_dimension_numbers<[1], [0], [0], [1], [0, 0, 1, 1], [], []>} : vector<8x8xbf16>, vector<8x8xbf16>, vector<8x8xf32> -> vector<8x8xf32>
    %67 = arith.truncf %66 : vector<8x8xf32> to vector<8x8xbf16>
    %c0_22 = arith.constant 0 : index
    %c16 = arith.constant 16 : index
    %68 = vector.load %arg6[%c0_22, %c16] : memref<8x32xbf16, #tpu.memory_space<vmem>>, vector<8x8xbf16>
    tpu.vector_store %arg6[%c0_22, %c16], %67 {strides = array<i32>} : memref<8x32xbf16, #tpu.memory_space<vmem>>, vector<8x8xbf16>,
    %69 = vector.extract_strided_slice %5 {offsets = [0, 24], sizes = [8, 8], strides = [1, 1]} : vector<8x96xbf16> to vector<8x8xbf16>
    %70 = vector.extract_strided_slice %5 {offsets = [0, 56], sizes = [8, 8], strides = [1, 1]} : vector<8x96xbf16> to vector<8x8xbf16>
    %71 = vector.extract_strided_slice %5 {offsets = [0, 88], sizes = [8, 8], strides = [1, 1]} : vector<8x96xbf16> to vector<8x8xbf16>
    %cst_23 = arith.constant dense<0.000000e+00> : vector<8x8xf32>
    %72 = tpu.matmul %69, %70, %cst_23 {dimension_numbers = #tpu.dot_dimension_numbers<[1], [1], [0], [0], [0, 0, 1, 0], [], []>} : vector<8x8xbf16>, vector<8x8xbf16>, vector<8x8xf32> -> vector<8x8xf32>
    %cst_24 = arith.constant 0xFF800000 : f32
    %73 = vector.broadcast %cst_24 : f32 to vector<8x8xf32>
    %74 = arith.select %8, %72, %73 : vector<8x8xi1>, vector<8x8xf32>
    %cst_25 = arith.constant dense<0xFF800000> : vector<8xf32>
    %75 = vector.multi_reduction <maximumf>, %74, %cst_25 [1] : vector<8x8xf32> to vector<8xf32>
    %76 = vector.shape_cast %75 : vector<8xf32> to vector<8x1xf32>
    %77 = vector.broadcast %76 : vector<8x1xf32> to vector<8x8xf32>
    %78 = arith.subf %74, %77 : vector<8x8xf32>
    %79 = math.exp %78 : vector<8x8xf32>
    %cst_26 = arith.constant dense<0.000000e+00> : vector<8xf32>
    %80 = vector.multi_reduction <add>, %79, %cst_26 [1] : vector<8x8xf32> to vector<8xf32>
    %81 = vector.shape_cast %80 : vector<8xf32> to vector<8x1xf32>
    %82 = tpu.reciprocal %81 {approx = true} : vector<8x1xf32> -> vector<8x1xf32>
    %83 = vector.broadcast %82 : vector<8x1xf32> to vector<8x8xf32>
    %84 = arith.mulf %79, %83 : vector<8x8xf32>
    %85 = arith.truncf %84 : vector<8x8xf32> to vector<8x8xbf16>
    %cst_27 = arith.constant dense<0.000000e+00> : vector<8x8xf32>
    %86 = tpu.matmul %85, %71, %cst_27 {dimension_numbers = #tpu.dot_dimension_numbers<[1], [0], [0], [1], [0, 0, 1, 1], [], []>} : vector<8x8xbf16>, vector<8x8xbf16>, vector<8x8xf32> -> vector<8x8xf32>
    %87 = arith.truncf %86 : vector<8x8xf32> to vector<8x8xbf16>
    %c0_28 = arith.constant 0 : index
    %c24 = arith.constant 24 : index
    %88 = vector.load %arg6[%c0_28, %c24] : memref<8x32xbf16, #tpu.memory_space<vmem>>, vector<8x8xbf16>
    tpu.vector_store %arg6[%c0_28, %c24], %87 {strides = array<i32>} : memref<8x32xbf16, #tpu.memory_space<vmem>>, vector<8x8xbf16>,
    %c0_29 = arith.constant 0 : index
    %c0_30 = arith.constant 0 : index
    %89 = vector.load %arg6[%c0_29, %c0_30] : memref<8x32xbf16, #tpu.memory_space<vmem>>, vector<8x32xbf16>
    %c0_31 = arith.constant 0 : index
    %c0_32 = arith.constant 0 : index
    %90 = vector.load %arg3[%c0_31, %c0_32] : memref<32x32xbf16, #tpu.memory_space<vmem>>, vector<32x32xbf16>
    %cst_33 = arith.constant dense<0.000000e+00> : vector<8x32xf32>
    %91 = tpu.matmul %89, %90, %cst_33 {dimension_numbers = #tpu.dot_dimension_numbers<[1], [0], [0], [1], [0, 0, 1, 1], [], []>} : vector<8x32xbf16>, vector<32x32xbf16>, vector<8x32xf32> -> vector<8x32xf32>
    %c0_34 = arith.constant 0 : index
    %c0_35 = arith.constant 0 : index
    %92 = vector.load %arg4[%c0_34, %c0_35] : memref<1x32xf32, #tpu.memory_space<vmem>>, vector<1x32xf32>
    %93 = vector.broadcast %92 : vector<1x32xf32> to vector<8x32xf32>
    %94 = arith.addf %91, %93 : vector<8x32xf32>
    %c0_36 = arith.constant 0 : index
    %c0_37 = arith.constant 0 : index
    %c0_38 = arith.constant 0 : index
    %95 = vector.load %arg5[%c0_36, %c0_37, %c0_38] : memref<1x8x32xf32, #tpu.memory_space<vmem>>, vector<1x8x32xf32>
    %96 = vector.shape_cast %95 : vector<1x8x32xf32> to vector<8x32xf32>
    %97 = vector.shape_cast %94 : vector<8x32xf32> to vector<1x8x32xf32>
    tpu.vector_store %arg5[%c0_36, %c0_37, %c0_38], %97 {strides = array<i32>} : memref<1x8x32xf32, #tpu.memory_space<vmem>>, vector<1x8x32xf32>,
    return
  }
  func.func @transform_0(%arg0: i32) -> (i32, i32, i32) {
    %c0_i32 = arith.constant 0 : i32
    %c0_i32_0 = arith.constant 0 : i32
    %c0_i32_1 = arith.constant 0 : i32
    return %arg0, %c0_i32, %c0_i32_0 : i32, i32, i32
  }
  func.func @transform_1(%arg0: i32) -> (i32, i32) {
    %c0_i32 = arith.constant 0 : i32
    %c0_i32_0 = arith.constant 0 : i32
    %c0_i32_1 = arith.constant 0 : i32
    return %c0_i32, %c0_i32_0 : i32, i32
  }
  func.func @transform_2(%arg0: i32) -> (i32, i32) {
    %c0_i32 = arith.constant 0 : i32
    %c0_i32_0 = arith.constant 0 : i32
    %c0_i32_1 = arith.constant 0 : i32
    return %c0_i32, %c0_i32_0 : i32, i32
  }
  func.func @transform_3(%arg0: i32) -> (i32, i32) {
    %c0_i32 = arith.constant 0 : i32
    %c0_i32_0 = arith.constant 0 : i32
    %c0_i32_1 = arith.constant 0 : i32
    return %c0_i32, %c0_i32_0 : i32, i32
  }
  func.func @transform_4(%arg0: i32) -> (i32, i32, i32) {
    %c0_i32 = arith.constant 0 : i32
    %c0_i32_0 = arith.constant 0 : i32
    %c0_i32_1 = arith.constant 0 : i32
    return %arg0, %c0_i32, %c0_i32_0 : i32, i32, i32
  }
}

module attributes {stable_mosaic.version = 11 : i64} {
  func.func @fused_mha_kernel(%arg0: i32, %arg1: memref<1x8x32xf32, #tpu.memory_space<vmem>>, %arg2: memref<32x96xbf16, #tpu.memory_space<vmem>>, %arg3: memref<32x32xbf16, #tpu.memory_space<vmem>>, %arg4: memref<1x32xf32, #tpu.memory_space<vmem>>, %arg5: memref<1x8x32xf32, #tpu.memory_space<vmem>>, %arg6: memref<8x32xbf16, #tpu.memory_space<vmem>>) attributes {dimension_semantics = [#tpu.dimension_semantics<parallel>], iteration_bounds = array<i64: 2>, scalar_prefetch = 0 : i64, scratch_operands = 1 : i64, tpu.core_type = #tpu.core_type<tc>, window_params = [{transform_indices = @transform_0, window_bounds = array<i64: 1, 8, 32>}, {pipeline_mode = #tpu.pipeline_mode<synchronous>, transform_indices = @transform_1, window_bounds = array<i64: 32, 96>}, {pipeline_mode = #tpu.pipeline_mode<synchronous>, transform_indices = @transform_2, window_bounds = array<i64: 32, 32>}, {pipeline_mode = #tpu.pipeline_mode<synchronous>, transform_indices = @transform_3, window_bounds = array<i64: 1, 32>}, {transform_indices = @transform_4, window_bounds = array<i64: 1, 8, 32>}]} {
    %c0 = arith.constant 0 : index
    %c0_0 = arith.constant 0 : index
    %c0_1 = arith.constant 0 : index
    %0 = vector.load %arg1[%c0, %c0_0, %c0_1] : memref<1x8x32xf32, #tpu.memory_space<vmem>>, vector<1x8x32xf32>
    %1 = vector.shape_cast %0 : vector<1x8x32xf32> to vector<8x32xf32>
    %2 = arith.truncf %1 : vector<8x32xf32> to vector<8x32xbf16>
    %c0_2 = arith.constant 0 : index
    %c0_3 = arith.constant 0 : index
    %3 = vector.load %arg2[%c0_2, %c0_3] : memref<32x96xbf16, #tpu.memory_space<vmem>>, vector<32x96xbf16>
    %cst = arith.constant dense<0.000000e+00> : vector<8x96xf32>
    %4 = tpu.matmul %2, %3, %cst {dimension_numbers = #tpu.dot_dimension_numbers<[1], [0], [0], [1], [0, 0, 1, 1], [], []>} : vector<8x32xbf16>, vector<32x96xbf16>, vector<8x96xf32> -> vector<8x96xf32>
    %5 = arith.truncf %4 : vector<8x96xf32> to vector<8x96xbf16>
    %6 = tpu.iota {dimensions = array<i32: 0>} : vector<8x8xi32>
    %7 = tpu.iota {dimensions = array<i32: 1>} : vector<8x8xi32>
    %8 = arith.cmpi sle, %7, %6 : vector<8x8xi32>
    %9 = vector.extract_strided_slice %5 {offsets = [0, 0], sizes = [8, 8], strides = [1, 1]} : vector<8x96xbf16> to vector<8x8xbf16>
    %10 = vector.extract_strided_slice %5 {offsets = [0, 32], sizes = [8, 8], strides = [1, 1]} : vector<8x96xbf16> to vector<8x8xbf16>
    %11 = vector.extract_strided_slice %5 {offsets = [0, 64], sizes = [8, 8], strides = [1, 1]} : vector<8x96xbf16> to vector<8x8xbf16>
    %cst_4 = arith.constant dense<0.000000e+00> : vector<8x8xf32>
    %12 = tpu.matmul %9, %10, %cst_4 {dimension_numbers = #tpu.dot_dimension_numbers<[1], [1], [0], [0], [0, 0, 1, 0], [], []>} : vector<8x8xbf16>, vector<8x8xbf16>, vector<8x8xf32> -> vector<8x8xf32>
    %cst_5 = arith.constant 0xFF800000 : f32
    %13 = vector.broadcast %cst_5 : f32 to vector<8x8xf32>
    %14 = arith.select %8, %12, %13 : vector<8x8xi1>, vector<8x8xf32>
    %cst_6 = arith.constant dense<0xFF800000> : vector<8xf32>
    %15 = vector.multi_reduction <maximumf>, %14, %cst_6 [1] : vector<8x8xf32> to vector<8xf32>
    %16 = vector.shape_cast %15 : vector<8xf32> to vector<8x1xf32>
    %17 = vector.broadcast %16 : vector<8x1xf32> to vector<8x8xf32>
    %18 = arith.subf %14, %17 : vector<8x8xf32>
    %19 = math.exp %18 : vector<8x8xf32>
    %cst_7 = arith.constant dense<0.000000e+00> : vector<8xf32>
    %20 = vector.multi_reduction <add>, %19, %cst_7 [1] : vector<8x8xf32> to vector<8xf32>
    %21 = vector.shape_cast %20 : vector<8xf32> to vector<8x1xf32>
    %22 = tpu.reciprocal %21 {approx = true} : vector<8x1xf32> -> vector<8x1xf32>
    %23 = vector.broadcast %22 : vector<8x1xf32> to vector<8x8xf32>
    %24 = arith.mulf %19, %23 : vector<8x8xf32>
    %25 = arith.truncf %24 : vector<8x8xf32> to vector<8x8xbf16>
    %cst_8 = arith.constant dense<0.000000e+00> : vector<8x8xf32>
    %26 = tpu.matmul %25, %11, %cst_8 {dimension_numbers = #tpu.dot_dimension_numbers<[1], [0], [0], [1], [0, 0, 1, 1], [], []>} : vector<8x8xbf16>, vector<8x8xbf16>, vector<8x8xf32> -> vector<8x8xf32>
    %27 = arith.truncf %26 : vector<8x8xf32> to vector<8x8xbf16>
    %c0_9 = arith.constant 0 : index
    %c0_10 = arith.constant 0 : index
    %28 = vector.load %arg6[%c0_9, %c0_10] : memref<8x32xbf16, #tpu.memory_space<vmem>>, vector<8x8xbf16>
    tpu.vector_store %arg6[%c0_9, %c0_10], %27 {strides = array<i32>} : memref<8x32xbf16, #tpu.memory_space<vmem>>, vector<8x8xbf16>,
    %29 = vector.extract_strided_slice %5 {offsets = [0, 8], sizes = [8, 8], strides = [1, 1]} : vector<8x96xbf16> to vector<8x8xbf16>
    %30 = vector.extract_strided_slice %5 {offsets = [0, 40], sizes = [8, 8], strides = [1, 1]} : vector<8x96xbf16> to vector<8x8xbf16>
    %31 = vector.extract_strided_slice %5 {offsets = [0, 72], sizes = [8, 8], strides = [1, 1]} : vector<8x96xbf16> to vector<8x8xbf16>
    %cst_11 = arith.constant dense<0.000000e+00> : vector<8x8xf32>
    %32 = tpu.matmul %29, %30, %cst_11 {dimension_numbers = #tpu.dot_dimension_numbers<[1], [1], [0], [0], [0, 0, 1, 0], [], []>} : vector<8x8xbf16>, vector<8x8xbf16>, vector<8x8xf32> -> vector<8x8xf32>
    %cst_12 = arith.constant 0xFF800000 : f32
    %33 = vector.broadcast %cst_12 : f32 to vector<8x8xf32>
    %34 = arith.select %8, %32, %33 : vector<8x8xi1>, vector<8x8xf32>
    %cst_13 = arith.constant dense<0xFF800000> : vector<8xf32>
    %35 = vector.multi_reduction <maximumf>, %34, %cst_13 [1] : vector<8x8xf32> to vector<8xf32>
    %36 = vector.shape_cast %35 : vector<8xf32> to vector<8x1xf32>
    %37 = vector.broadcast %36 : vector<8x1xf32> to vector<8x8xf32>
    %38 = arith.subf %34, %37 : vector<8x8xf32>
    %39 = math.exp %38 : vector<8x8xf32>
    %cst_14 = arith.constant dense<0.000000e+00> : vector<8xf32>
    %40 = vector.multi_reduction <add>, %39, %cst_14 [1] : vector<8x8xf32> to vector<8xf32>
    %41 = vector.shape_cast %40 : vector<8xf32> to vector<8x1xf32>
    %42 = tpu.reciprocal %41 {approx = true} : vector<8x1xf32> -> vector<8x1xf32>
    %43 = vector.broadcast %42 : vector<8x1xf32> to vector<8x8xf32>
    %44 = arith.mulf %39, %43 : vector<8x8xf32>
    %45 = arith.truncf %44 : vector<8x8xf32> to vector<8x8xbf16>
    %cst_15 = arith.constant dense<0.000000e+00> : vector<8x8xf32>
    %46 = tpu.matmul %45, %31, %cst_15 {dimension_numbers = #tpu.dot_dimension_numbers<[1], [0], [0], [1], [0, 0, 1, 1], [], []>} : vector<8x8xbf16>, vector<8x8xbf16>, vector<8x8xf32> -> vector<8x8xf32>
    %47 = arith.truncf %46 : vector<8x8xf32> to vector<8x8xbf16>
    %c0_16 = arith.constant 0 : index
    %c8 = arith.constant 8 : index
    %48 = vector.load %arg6[%c0_16, %c8] : memref<8x32xbf16, #tpu.memory_space<vmem>>, vector<8x8xbf16>
    tpu.vector_store %arg6[%c0_16, %c8], %47 {strides = array<i32>} : memref<8x32xbf16, #tpu.memory_space<vmem>>, vector<8x8xbf16>,
    %49 = vector.extract_strided_slice %5 {offsets = [0, 16], sizes = [8, 8], strides = [1, 1]} : vector<8x96xbf16> to vector<8x8xbf16>
    %50 = vector.extract_strided_slice %5 {offsets = [0, 48], sizes = [8, 8], strides = [1, 1]} : vector<8x96xbf16> to vector<8x8xbf16>
    %51 = vector.extract_strided_slice %5 {offsets = [0, 80], sizes = [8, 8], strides = [1, 1]} : vector<8x96xbf16> to vector<8x8xbf16>
    %cst_17 = arith.constant dense<0.000000e+00> : vector<8x8xf32>
    %52 = tpu.matmul %49, %50, %cst_17 {dimension_numbers = #tpu.dot_dimension_numbers<[1], [1], [0], [0], [0, 0, 1, 0], [], []>} : vector<8x8xbf16>, vector<8x8xbf16>, vector<8x8xf32> -> vector<8x8xf32>
    %cst_18 = arith.constant 0xFF800000 : f32
    %53 = vector.broadcast %cst_18 : f32 to vector<8x8xf32>
    %54 = arith.select %8, %52, %53 : vector<8x8xi1>, vector<8x8xf32>
    %cst_19 = arith.constant dense<0xFF800000> : vector<8xf32>
    %55 = vector.multi_reduction <maximumf>, %54, %cst_19 [1] : vector<8x8xf32> to vector<8xf32>
    %56 = vector.shape_cast %55 : vector<8xf32> to vector<8x1xf32>
    %57 = vector.broadcast %56 : vector<8x1xf32> to vector<8x8xf32>
    %58 = arith.subf %54, %57 : vector<8x8xf32>
    %59 = math.exp %58 : vector<8x8xf32>
    %cst_20 = arith.constant dense<0.000000e+00> : vector<8xf32>
    %60 = vector.multi_reduction <add>, %59, %cst_20 [1] : vector<8x8xf32> to vector<8xf32>
    %61 = vector.shape_cast %60 : vector<8xf32> to vector<8x1xf32>
    %62 = tpu.reciprocal %61 {approx = true} : vector<8x1xf32> -> vector<8x1xf32>
    %63 = vector.broadcast %62 : vector<8x1xf32> to vector<8x8xf32>
    %64 = arith.mulf %59, %63 : vector<8x8xf32>
    %65 = arith.truncf %64 : vector<8x8xf32> to vector<8x8xbf16>
    %cst_21 = arith.constant dense<0.000000e+00> : vector<8x8xf32>
    %66 = tpu.matmul %65, %51, %cst_21 {dimension_numbers = #tpu.dot_dimension_numbers<[1], [0], [0], [1], [0, 0, 1, 1], [], []>} : vector<8x8xbf16>, vector<8x8xbf16>, vector<8x8xf32> -> vector<8x8xf32>
    %67 = arith.truncf %66 : vector<8x8xf32> to vector<8x8xbf16>
    %c0_22 = arith.constant 0 : index
    %c16 = arith.constant 16 : index
    %68 = vector.load %arg6[%c0_22, %c16] : memref<8x32xbf16, #tpu.memory_space<vmem>>, vector<8x8xbf16>
    tpu.vector_store %arg6[%c0_22, %c16], %67 {strides = array<i32>} : memref<8x32xbf16, #tpu.memory_space<vmem>>, vector<8x8xbf16>,
    %69 = vector.extract_strided_slice %5 {offsets = [0, 24], sizes = [8, 8], strides = [1, 1]} : vector<8x96xbf16> to vector<8x8xbf16>
    %70 = vector.extract_strided_slice %5 {offsets = [0, 56], sizes = [8, 8], strides = [1, 1]} : vector<8x96xbf16> to vector<8x8xbf16>
    %71 = vector.extract_strided_slice %5 {offsets = [0, 88], sizes = [8, 8], strides = [1, 1]} : vector<8x96xbf16> to vector<8x8xbf16>
    %cst_23 = arith.constant dense<0.000000e+00> : vector<8x8xf32>
    %72 = tpu.matmul %69, %70, %cst_23 {dimension_numbers = #tpu.dot_dimension_numbers<[1], [1], [0], [0], [0, 0, 1, 0], [], []>} : vector<8x8xbf16>, vector<8x8xbf16>, vector<8x8xf32> -> vector<8x8xf32>
    %cst_24 = arith.constant 0xFF800000 : f32
    %73 = vector.broadcast %cst_24 : f32 to vector<8x8xf32>
    %74 = arith.select %8, %72, %73 : vector<8x8xi1>, vector<8x8xf32>
    %cst_25 = arith.constant dense<0xFF800000> : vector<8xf32>
    %75 = vector.multi_reduction <maximumf>, %74, %cst_25 [1] : vector<8x8xf32> to vector<8xf32>
    %76 = vector.shape_cast %75 : vector<8xf32> to vector<8x1xf32>
    %77 = vector.broadcast %76 : vector<8x1xf32> to vector<8x8xf32>
    %78 = arith.subf %74, %77 : vector<8x8xf32>
    %79 = math.exp %78 : vector<8x8xf32>
    %cst_26 = arith.constant dense<0.000000e+00> : vector<8xf32>
    %80 = vector.multi_reduction <add>, %79, %cst_26 [1] : vector<8x8xf32> to vector<8xf32>
    %81 = vector.shape_cast %80 : vector<8xf32> to vector<8x1xf32>
    %82 = tpu.reciprocal %81 {approx = true} : vector<8x1xf32> -> vector<8x1xf32>
    %83 = vector.broadcast %82 : vector<8x1xf32> to vector<8x8xf32>
    %84 = arith.mulf %79, %83 : vector<8x8xf32>
    %85 = arith.truncf %84 : vector<8x8xf32> to vector<8x8xbf16>
    %cst_27 = arith.constant dense<0.000000e+00> : vector<8x8xf32>
    %86 = tpu.matmul %85, %71, %cst_27 {dimension_numbers = #tpu.dot_dimension_numbers<[1], [0], [0], [1], [0, 0, 1, 1], [], []>} : vector<8x8xbf16>, vector<8x8xbf16>, vector<8x8xf32> -> vector<8x8xf32>
    %87 = arith.truncf %86 : vector<8x8xf32> to vector<8x8xbf16>
    %c0_28 = arith.constant 0 : index
    %c24 = arith.constant 24 : index
    %88 = vector.load %arg6[%c0_28, %c24] : memref<8x32xbf16, #tpu.memory_space<vmem>>, vector<8x8xbf16>
    tpu.vector_store %arg6[%c0_28, %c24], %87 {strides = array<i32>} : memref<8x32xbf16, #tpu.memory_space<vmem>>, vector<8x8xbf16>,
    %c0_29 = arith.constant 0 : index
    %c0_30 = arith.constant 0 : index
    %89 = vector.load %arg6[%c0_29, %c0_30] : memref<8x32xbf16, #tpu.memory_space<vmem>>, vector<8x32xbf16>
    %c0_31 = arith.constant 0 : index
    %c0_32 = arith.constant 0 : index
    %90 = vector.load %arg3[%c0_31, %c0_32] : memref<32x32xbf16, #tpu.memory_space<vmem>>, vector<32x32xbf16>
    %cst_33 = arith.constant dense<0.000000e+00> : vector<8x32xf32>
    %91 = tpu.matmul %89, %90, %cst_33 {dimension_numbers = #tpu.dot_dimension_numbers<[1], [0], [0], [1], [0, 0, 1, 1], [], []>} : vector<8x32xbf16>, vector<32x32xbf16>, vector<8x32xf32> -> vector<8x32xf32>
    %c0_34 = arith.constant 0 : index
    %c0_35 = arith.constant 0 : index
    %92 = vector.load %arg4[%c0_34, %c0_35] : memref<1x32xf32, #tpu.memory_space<vmem>>, vector<1x32xf32>
    %93 = vector.broadcast %92 : vector<1x32xf32> to vector<8x32xf32>
    %94 = arith.addf %91, %93 : vector<8x32xf32>
    %c0_36 = arith.constant 0 : index
    %c0_37 = arith.constant 0 : index
    %c0_38 = arith.constant 0 : index
    %95 = vector.load %arg5[%c0_36, %c0_37, %c0_38] : memref<1x8x32xf32, #tpu.memory_space<vmem>>, vector<1x8x32xf32>
    %96 = vector.shape_cast %95 : vector<1x8x32xf32> to vector<8x32xf32>
    %97 = vector.shape_cast %94 : vector<8x32xf32> to vector<1x8x32xf32>
    tpu.vector_store %arg5[%c0_36, %c0_37, %c0_38], %97 {strides = array<i32>} : memref<1x8x32xf32, #tpu.memory_space<vmem>>, vector<1x8x32xf32>,
    return
  }
  func.func @transform_0(%arg0: i32) -> (i32, i32, i32) {
    %c0_i32 = arith.constant 0 : i32
    %c0_i32_0 = arith.constant 0 : i32
    %c0_i32_1 = arith.constant 0 : i32
    return %arg0, %c0_i32, %c0_i32_0 : i32, i32, i32
  }
  func.func @transform_1(%arg0: i32) -> (i32, i32) {
    %c0_i32 = arith.constant 0 : i32
    %c0_i32_0 = arith.constant 0 : i32
    %c0_i32_1 = arith.constant 0 : i32
    return %c0_i32, %c0_i32_0 : i32, i32
  }
  func.func @transform_2(%arg0: i32) -> (i32, i32) {
    %c0_i32 = arith.constant 0 : i32
    %c0_i32_0 = arith.constant 0 : i32
    %c0_i32_1 = arith.constant 0 : i32
    return %c0_i32, %c0_i32_0 : i32, i32
  }
  func.func @transform_3(%arg0: i32) -> (i32, i32) {
    %c0_i32 = arith.constant 0 : i32
    %c0_i32_0 = arith.constant 0 : i32
    %c0_i32_1 = arith.constant 0 : i32
    return %c0_i32, %c0_i32_0 : i32, i32
  }
  func.func @transform_4(%arg0: i32) -> (i32, i32, i32) {
    %c0_i32 = arith.constant 0 : i32
    %c0_i32_0 = arith.constant 0 : i32
    %c0_i32_1 = arith.constant 0 : i32
    return %arg0, %c0_i32, %c0_i32_0 : i32, i32, i32
  }
}

</mosaic_0001>

<llo_original>
// kernel: tpu_custom_call.1
$region0: #{tpu_custom_call.1}
  #allocation0 [shape = 'u32[]', space=smem, size = 0x4, offset = 0x4, fixed_abs, tag = 'smem constant byte address 0x4 - core index']
  #allocation1 [shape = 'u32[144,128]{1,0:T(1,128)}', space=vmem, size = 0x12000, scoped, tag = 'internal scratch']
  #allocation2 [shape = 'bf16[8,32]{1,0:T(8,128)(2,1)}', space=vmem, size = 0x800, scoped, tag = 'scratch operand']
  %s0 = inlined_call_operand.hbm [shape: f32[2,8,32], index: 0, kind: input, shape index: {}]
  %s1 = inlined_call_operand.hbm [shape: bf16[32,96], index: 1, kind: input, shape index: {}]
  %s2 = inlined_call_operand.hbm [shape: bf16[32,32], index: 2, kind: input, shape index: {}]
  %s3 = inlined_call_operand.vmem [shape: f32[1,32], index: 3, kind: input, shape index: {}]
  %s4 = inlined_call_operand.hbm [shape: f32[2,8,32], index: 4, kind: output, shape index: {}]
  %s5 = sld [smem:[#allocation0]]
  $region61: #{tpu_custom_call.1} parent=0
    _
  %s7 = ssub.s32 1, %s5
  %s8 = scalar_select 0, %s7, %s5
  $region1: #{tpu_custom_call.1} parent=0
    #allocation3 [shape = 'u8[8192]{0}', space=vmem, size = 0x2000, scoped, tag = 'input window, operand 0']
    #allocation4 [shape = 's32[2]{0}', space=sflag, size = 0x8, scoped, tag = 'scoped memory for tpu_custom_call.1']
    #allocation5 [shape = 's32[2]{0}', space=sflag, size = 0x8, scoped, tag = 'scoped memory for tpu_custom_call.1']
    #allocation6 [shape = 'u8[8192]{0}', space=vmem, size = 0x2000, scoped, tag = 'input window, operand 1, single buffered']
    #allocation7 [shape = 's32[1]{0}', space=sflag, size = 0x4, scoped, tag = 'scoped memory for tpu_custom_call.1']
    #allocation8 [shape = 'u8[8192]{0}', space=vmem, size = 0x2000, scoped, tag = 'input window, operand 2, single buffered']
    #allocation9 [shape = 'u8[8192]{0}', space=vmem, size = 0x2000, scoped, tag = 'output window, operand 0']
    %9 = vsyncpa [#allocation4], 0
    %s10 = scalar_lea.sflag [#allocation4], 1
    %11 = vsyncpa %s10, 0
    %12 = vsyncpa [#allocation7], 0
    %13 = vsyncpa [#allocation5], 0
    %s14 = scalar_lea.sflag [#allocation5], 1
    %15 = vsyncpa %s14, 0
    loop: start=0, step=1, limit=4
    $region2: #{tpu_custom_call.1} parent=1 // loop_pre_header
      _
    $region3: #{tpu_custom_call.1} parent=1 // loop_header
      %s17 = sphi 0, %s21
      %p18 = scmp.ge.s32.totalorder %s17, 4
      %s27 = sphi 0, %s29
      %s30 = sphi 0, %s27
      %s31 = sphi 0, %s30
      %s47 = sphi 0, %s31
      %s51 = sphi 0, %s51
      %s53 = sphi 0, %s51
      %s54 = sphi 0, %s53
      %s68 = sphi 0, %s54
      %s72 = sphi 0, %s72
      %s74 = sphi 0, %s72
      %s75 = sphi 0, %s74
      %s89 = sphi 0, %s75
      %s93 = sphi 0, %s93
      %s95 = sphi 0, %s93
      %s96 = sphi 0, %s95
      %s110 = sphi 0, %s96
      %s116 = sphi 0, %s118
      %s119 = sphi 0, %s116
      %s120 = sphi 0, %s119
      %s136 = sphi 0, %s120
    $region4: #{tpu_custom_call.1} parent=1 // loop_header_branch
      %20 = sbr.rel (%p18) target = $region8
    $region5: #{tpu_custom_call.1} parent=1 // loop_body
      %s22 = ssub.s32 %s17, 1
      %s23 = ssub.s32 %s17, 2
      %s24 = sadd.s32 %s17, 1
      %s25 = ssub.s32 %s17, %s24
      %p26 = scmp.eq.s32.totalorder %s25, 0
      %s28 = sadd.s32 %s27, 1
      %s29 = scalar_select %p26, %s27, %s28
      %p32 = pneg %p26
      %p33 = scmp.eq.s32.totalorder %s17, 1
      %p34 = por %p32, %p33
      %p35 = scmp.ne.s32.totalorder %s27, %s30
      %p36 = scmp.eq.s32.totalorder %s17, 0
      %p37 = por %p35, %p36
      %p38 = scmp.ne.s32.totalorder %s27, %s30
      %p39 = scmp.eq.s32.totalorder %s22, 1
      %p40 = por %p38, %p39
      %p41 = scmp.ne.s32.totalorder %s30, %s31
      %p42 = scmp.eq.s32.totalorder %s22, 0
      %p43 = por %p41, %p42
      %p44 = scmp.ne.s32.totalorder %s30, %s31
      %p45 = scmp.eq.s32.totalorder %s23, 1
      %p46 = por %p44, %p45
      %p48 = scmp.ne.s32.totalorder %s31, %s47
      %p49 = scmp.eq.s32.totalorder %s23, 0
      %p50 = por %p48, %p49
      %s52 = sadd.s32 %s51, 1
      %p55 = scmp.eq.s32.totalorder %s17, 1
      %p56 = scmp.ne.s32.totalorder %s51, %s53
      %p57 = scmp.eq.s32.totalorder %s17, 0
      %p58 = por %p56, %p57
      %p59 = scmp.ne.s32.totalorder %s51, %s53
      %p60 = scmp.eq.s32.totalorder %s22, 1
      %p61 = por %p59, %p60
      %p62 = scmp.ne.s32.totalorder %s53, %s54
      %p63 = scmp.eq.s32.totalorder %s22, 0
      %p64 = por %p62, %p63
      %p65 = scmp.ne.s32.totalorder %s53, %s54
      %p66 = scmp.eq.s32.totalorder %s23, 1
      %p67 = por %p65, %p66
      %p69 = scmp.ne.s32.totalorder %s54, %s68
      %p70 = scmp.eq.s32.totalorder %s23, 0
      %p71 = por %p69, %p70
      %s73 = sadd.s32 %s72, 1
      %p76 = scmp.eq.s32.totalorder %s17, 1
      %p77 = scmp.ne.s32.totalorder %s72, %s74
      %p78 = scmp.eq.s32.totalorder %s17, 0
      %p79 = por %p77, %p78
      %p80 = scmp.ne.s32.totalorder %s72, %s74
      %p81 = scmp.eq.s32.totalorder %s22, 1
      %p82 = por %p80, %p81
      %p83 = scmp.ne.s32.totalorder %s74, %s75
      %p84 = scmp.eq.s32.totalorder %s22, 0
      %p85 = por %p83, %p84
      %p86 = scmp.ne.s32.totalorder %s74, %s75
      %p87 = scmp.eq.s32.totalorder %s23, 1
      %p88 = por %p86, %p87
      %p90 = scmp.ne.s32.totalorder %s75, %s89
      %p91 = scmp.eq.s32.totalorder %s23, 0
      %p92 = por %p90, %p91
      %s94 = sadd.s32 %s93, 1
      %p97 = scmp.eq.s32.totalorder %s17, 1
      %p98 = scmp.ne.s32.totalorder %s93, %s95
      %p99 = scmp.eq.s32.totalorder %s17, 0
      %p100 = por %p98, %p99
      %p101 = scmp.ne.s32.totalorder %s93, %s95
      %p102 = scmp.eq.s32.totalorder %s22, 1
      %p103 = por %p101, %p102
      %p104 = scmp.ne.s32.totalorder %s95, %s96
      %p105 = scmp.eq.s32.totalorder %s22, 0
      %p106 = por %p104, %p105
      %p107 = scmp.ne.s32.totalorder %s95, %s96
      %p108 = scmp.eq.s32.totalorder %s23, 1
      %p109 = por %p107, %p108
      %p111 = scmp.ne.s32.totalorder %s96, %s110
      %p112 = scmp.eq.s32.totalorder %s23, 0
      %p113 = por %p111, %p112
      %s114 = ssub.s32 %s17, %s24
      %p115 = scmp.eq.s32.totalorder %s114, 0
      %s117 = sadd.s32 %s116, 1
      %s118 = scalar_select %p115, %s116, %s117
      %p121 = pneg %p115
      %p122 = scmp.eq.s32.totalorder %s17, 1
      %p123 = por %p121, %p122
      %p124 = scmp.ne.s32.totalorder %s116, %s119
      %p125 = scmp.eq.s32.totalorder %s17, 0
      %p126 = por %p124, %p125
      %p127 = scmp.ne.s32.totalorder %s116, %s119
      %p128 = scmp.eq.s32.totalorder %s22, 1
      %p129 = por %p127, %p128
      %p130 = scmp.ne.s32.totalorder %s119, %s120
      %p131 = scmp.eq.s32.totalorder %s22, 0
      %p132 = por %p130, %p131
      %p133 = scmp.ne.s32.totalorder %s119, %s120
      %p134 = scmp.eq.s32.totalorder %s23, 1
      %p135 = por %p133, %p134
      %p137 = scmp.ne.s32.totalorder %s120, %s136
      %p138 = scmp.eq.s32.totalorder %s23, 0
      %p139 = por %p137, %p138
      %p140 = scmp.le.s32.totalorder 1, %s17
      %p141 = scmp.lt.s32.totalorder %s17, 3
      %p142 = pnand %p140, %p141
      %p143 = pneg %p142
      // Predicated region
      $region9: #{tpu_custom_call.1} parent=5 // pred_check
        _
      $region10: #{tpu_custom_call.1} parent=5 // pred_check_branch
        %145 = sbr.rel (%p142) target = $region12
      $region11: #{tpu_custom_call.1} parent=5 // pred_region
        %s146 = ssub.s32 %s17, 1
        // Predicated region
        $region13: #{tpu_custom_call.1} parent=11 // pred_check
          %p147 = pneg %p64
        $region14: #{tpu_custom_call.1} parent=11 // pred_check_branch
          %149 = sbr.rel (%p147) target = $region16
        $region15: #{tpu_custom_call.1} parent=11 // pred_region
          %s151 = ssub.s32 256, 256
          %152 = vsyncadd [#allocation7], %s151
          %s153 = sshll.u32 [#allocation6], 4
          %s154 = int_to_ptr.vmem [resolvable:$true] %s153
          %159 = dma.hbm_to_vmem [thread:$0]  %s1, 256, %s154, [#allocation7], 64, 64, 4
        $region16: #{tpu_custom_call.1} parent=11 // pred_fallthru
          _
        // Predicated region
        $region17: #{tpu_custom_call.1} parent=11 // pred_check
          %p160 = pneg %p85
        $region18: #{tpu_custom_call.1} parent=11 // pred_check_branch
          %162 = sbr.rel (%p160) target = $region20
        $region19: #{tpu_custom_call.1} parent=11 // pred_region
          %s164 = ssub.s32 256, 256
          %165 = vsyncadd [#allocation7], %s164
          %s166 = sshll.u32 [#allocation8], 4
          %s167 = int_to_ptr.vmem [resolvable:$true] %s166
          %172 = dma.hbm_to_vmem [thread:$0]  %s2, 256, %s167, [#allocation7], 64, 64, 4
        $region20: #{tpu_custom_call.1} parent=11 // pred_fallthru
          _
        // Predicated region
        $region21: #{tpu_custom_call.1} parent=11 // pred_check
          %p173 = pneg %p106
        $region22: #{tpu_custom_call.1} parent=11 // pred_check_branch
          %175 = sbr.rel (%p173) target = $region24
        $region23: #{tpu_custom_call.1} parent=11 // pred_region
          _
        $region24: #{tpu_custom_call.1} parent=11 // pred_fallthru
          _
      $region12: #{tpu_custom_call.1} parent=5 // pred_fallthru
        _
      %p176 = scmp.lt.s32.totalorder %s17, 2
      // Predicated region
      $region25: #{tpu_custom_call.1} parent=5 // pred_check
        %p177 = pneg %p176
      $region26: #{tpu_custom_call.1} parent=5 // pred_check_branch
        %179 = sbr.rel (%p177) target = $region28
      $region27: #{tpu_custom_call.1} parent=5 // pred_region
        // Predicated region
        $region29: #{tpu_custom_call.1} parent=27 // pred_check
          %p180 = pneg %p37
        $region30: #{tpu_custom_call.1} parent=27 // pred_check_branch
          %182 = sbr.rel (%p180) target = $region32
        $region31: #{tpu_custom_call.1} parent=27 // pred_region
          %s183 = sand.u32 %s27, 1
          %s184 = scalar_lea.sflag [#allocation4], %s183
          %s185 = sand.u32 %s27, 1
          %s186 = smul.addr %s185, 8
          %s187 = scalar_lea.vmem [#allocation3], %s186
          %s189 = ssub.s32 128, 128
          %190 = vsyncadd %s184, %s189
          %s191 = smul.addr %s17, 128
          %s192 = scalar_lea.hbm %s0, %s191
          %s194 = sshll.u32 %s187, 4
          %s195 = int_to_ptr.vmem [resolvable:$true] %s194
          %197 = dma.hbm_to_vmem [thread:$0]  %s192, 128, %s195, %s184
        $region32: #{tpu_custom_call.1} parent=27 // pred_fallthru
          _
      $region28: #{tpu_custom_call.1} parent=5 // pred_fallthru
        _
      %p198 = scmp.le.s32.totalorder 1, %s17
      %p199 = scmp.lt.s32.totalorder %s17, 3
      %p200 = pnand %p198, %p199
      %p201 = pneg %p200
      // Predicated region
      $region33: #{tpu_custom_call.1} parent=5 // pred_check
        _
      $region34: #{tpu_custom_call.1} parent=5 // pred_check_branch
        %203 = sbr.rel (%p200) target = $region36
      $region35: #{tpu_custom_call.1} parent=5 // pred_region
        %s204 = ssub.s32 %s17, 1
        %s205 = sand.u32 %s30, 1
        %s206 = scalar_lea.sflag [#allocation4], %s205
        %s207 = sand.u32 %s30, 1
        %s208 = smul.addr %s207, 8
        %s209 = scalar_lea.vmem [#allocation3], %s208
        // Predicated region
        $region37: #{tpu_custom_call.1} parent=35 // pred_check
          %p210 = pneg %p43
        $region38: #{tpu_custom_call.1} parent=35 // pred_check_branch
          %212 = sbr.rel (%p210) target = $region40
        $region39: #{tpu_custom_call.1} parent=35 // pred_region
          %213 = dma.done %s206, 128
        $region40: #{tpu_custom_call.1} parent=35 // pred_fallthru
          _
        // Predicated region
        $region41: #{tpu_custom_call.1} parent=35 // pred_check
          %p214 = pneg %p64
        $region42: #{tpu_custom_call.1} parent=35 // pred_check_branch
          %216 = sbr.rel (%p214) target = $region44
        $region43: #{tpu_custom_call.1} parent=35 // pred_region
          %217 = dma.done [#allocation7], 256
        $region44: #{tpu_custom_call.1} parent=35 // pred_fallthru
          _
        // Predicated region
        $region45: #{tpu_custom_call.1} parent=35 // pred_check
          %p218 = pneg %p85
        $region46: #{tpu_custom_call.1} parent=35 // pred_check_branch
          %220 = sbr.rel (%p218) target = $region48
        $region47: #{tpu_custom_call.1} parent=35 // pred_region
          %221 = dma.done [#allocation7], 256
        $region48: #{tpu_custom_call.1} parent=35 // pred_fallthru
          _
        %s222 = sand.u32 %s30, 1
        %s223 = scalar_lea.sflag [#allocation4], %s222
        %s224 = sand.u32 %s30, 1
        %s225 = smul.addr %s224, 8
        %s226 = scalar_lea.vmem [#allocation3], %s225
        %p227 = pneg %p43
        %p228 = pneg %p40
        %p229 = pneg %p64
        %p230 = pneg %p61
        %p231 = pneg %p85
        %p232 = pneg %p82
        %p233 = pneg %p106
        %p234 = pneg %p103
        %p235 = pneg %p132
        %p236 = pneg %p129
        %s237 = sand.u32 %s119, 1
        %s238 = scalar_lea.sflag [#allocation5], %s237
        %s239 = sand.u32 %s119, 1
        %s240 = smul.addr %s239, 8
        %s241 = scalar_lea.vmem [#allocation9], %s240
        %v243 = vld [vmem:[%s209] sm:$0xff]
        %v244 = vpack.c.bf16 %v243, %v243
        %v245 = vld [vmem:[#allocation6] sm:$0xf]
        %v246 = vld [vmem:[#allocation6 + $0x4] sm:$0xf]
        %v247 = vld [vmem:[#allocation6 + $0x8] sm:$0xf]
        %v248 = vld [vmem:[#allocation6 + $0xc] sm:$0xf]
        %v253 = vunpack.c.l.b16 %v245
        %v254 = vunpack.c.l.b16 %v246
        %v255 = vunpack.c.l.b16 %v247
        %v256 = vunpack.c.l.b16 %v248
        %v257 = vpack.c.b16 %v254, %v253
        %v258 = vpack.c.b16 %v256, %v255
        %vm261 = vcmask 261120
        %v263 = vsel %vm261, %v244, 0
        %265 = vmatprep.subr.bf16.mxu0 0
        %266 = vmatpush1.bf16.msra.mxu0 0
        %267 = vmatprep.subr.bf16.mxu0 0
        %268 = vmatpush1.bf16.msra.mxu0 0
        %269 = vmatprep.subr.bf16.mxu0 0
        %270 = vmatpush1.bf16.msra.mxu0 0
        %271 = vmatprep.subr.bf16.mxu0 0
        %272 = vmatpush1.bf16.msra.mxu0 0
        %273 = vmatprep.subr.bf16.mxu0 0
        %274 = vmatpush1.bf16.msra.mxu0 0
        %275 = vmatprep.subr.bf16.mxu0 0
        %276 = vmatpush1.bf16.msra.mxu0 0
        %277 = vmatprep.subr.bf16.mxu0 0
        %278 = vmatpush1.bf16.msra.mxu0 %v258
        %279 = vmatprep.subr.bf16.mxu0 0
        %280 = vmatpush1.bf16.msra.mxu0 %v257
        %281 = vmatprep.subr.bf16.mxu0 0
        %282 = vmatpush2.bf16.msra.mxu0 0
        %283 = vmatprep.subr.bf16.mxu0 0
        %284 = vmatpush2.bf16.msra.mxu0 0
        %285 = vmatprep.subr.bf16.mxu0 0
        %286 = vmatpush2.bf16.msra.mxu0 0
        %287 = vmatprep.subr.bf16.mxu0 0
        %288 = vmatpush2.bf16.msra.mxu0 0
        %289 = vmatprep.subr.bf16.mxu0 0
        %290 = vmatpush2.bf16.msra.mxu0 0
        %291 = vmatprep.subr.bf16.mxu0 0
        %292 = vmatpush2.bf16.msra.mxu0 0
        %293 = vmatprep.subr.bf16.mxu0 0
        %294 = vmatpush2.bf16.msra.mxu0 0
        %295 = vmatprep.subr.bf16.mxu0 0
        %296 = vmatpush2.bf16.msra.mxu0 0
        %297 = vmatprep.mubr.bf16.mxu0 0
        %298 = vmatmul.mubr.bf16.gmra.mxu0 %v263
        %v299 = vpop.f32.mrf.mxu0
        %v300 = vadd.f32 0.0, %v299
        %v301 = vpop.f32.mrf.mxu0
        %v302 = vpop.f32.mrf.mxu0
        %v303 = vpop.f32.mrf.mxu0
        %304 = vdwg.mxu0
        %v305 = vpack.c.bf16 %v300, %v300
        %v306 = vlaneseq
        %v307 = vshrl.u32 %v306, 7
        %v308 = vlaneseq
        %v309 = vand.u32 %v308, 127
        %vm310 = vcmp.le.s32.totalorder %v309, %v307
        %312 = vrot.lane.b32.xlu0 %v305, 96
        %v313 = vpop.permute.xlu0 %312
        %vm314 = vcmask 64512
        %v316 = vsel %vm314, %v305, 0
        %v319 = vsel %vm314, %v313, 0
        %321 = vmatprep.subr.bf16.mxu0 0
        %322 = vmatpush1.bf16.xpose.msra.mxu0 0
        %323 = vmatprep.subr.bf16.mxu0 0
        %324 = vmatpush1.bf16.xpose.msra.mxu0 0
        %325 = vmatprep.subr.bf16.mxu0 0
        %326 = vmatpush1.bf16.xpose.msra.mxu0 0
        %327 = vmatprep.subr.bf16.mxu0 0
        %328 = vmatpush1.bf16.xpose.msra.mxu0 0
        %329 = vmatprep.subr.bf16.mxu0 0
        %330 = vmatpush1.bf16.xpose.msra.mxu0 0
        %331 = vmatprep.subr.bf16.mxu0 0
        %332 = vmatpush1.bf16.xpose.msra.mxu0 0
        %333 = vmatprep.subr.bf16.mxu0 0
        %334 = vmatpush1.bf16.xpose.msra.mxu0 0
        %335 = vmatprep.subr.bf16.mxu0 0
        %336 = vmatpush1.bf16.xpose.msra.mxu0 %v319
        %337 = vmatprep.subr.bf16.mxu0 0
        %338 = vmatpush2.bf16.xpose.msra.mxu0 0
        %339 = vmatprep.subr.bf16.mxu0 0
        %340 = vmatpush2.bf16.xpose.msra.mxu0 0
        %341 = vmatprep.subr.bf16.mxu0 0
        %342 = vmatpush2.bf16.xpose.msra.mxu0 0
        %343 = vmatprep.subr.bf16.mxu0 0
        %344 = vmatpush2.bf16.xpose.msra.mxu0 0
        %345 = vmatprep.subr.bf16.mxu0 0
        %346 = vmatpush2.bf16.xpose.msra.mxu0 0
        %347 = vmatprep.subr.bf16.mxu0 0
        %348 = vmatpush2.bf16.xpose.msra.mxu0 0
        %349 = vmatprep.subr.bf16.mxu0 0
        %350 = vmatpush2.bf16.xpose.msra.mxu0 0
        %351 = vmatprep.subr.bf16.mxu0 0
        %352 = vmatpush2.bf16.xpose.msra.mxu0 0
        %353 = vmatprep.mubr.bf16.mxu0 0
        %354 = vmatmul.mubr.bf16.gmra.mxu0 %v316
        %v355 = vpop.f32.mrf.mxu0
        %v356 = vadd.f32 0.0, %v355
        %v357 = vpop.f32.mrf.mxu0
        %v358 = vpop.f32.mrf.mxu0
        %v359 = vpop.f32.mrf.mxu0
        %360 = vdwg.mxu0
        %v361 = vsel %vm310, %v356, -inf
        %v362 = vsel %vm314, %v361, -inf
        %363 = vmax.xlane.f32.xlu0 %v362
        %v364 = vpop.xlane.xlu0 %363
        %v365 = vsub.f32 %v361, %v364
        %v366 = vmul.f32 %v365, 1.442695
        %v367 = vpow.pop %v366
        %v368 = vsel %vm314, %v367, 0.0
        %369 = vadd.xlane.f32.xlu0 %v368
        %v370 = vpop.xlane.xlu0 %369
        %v371 = vrcp.pop %v370
        %v372 = vmul.f32 %v367, %v371
        %v373 = vpack.c.bf16 %v372, %v372
        %374 = vrot.lane.b32.xlu0 %v305, 64
        %v375 = vpop.permute.xlu0 %374
        %v377 = vsel %vm314, %v373, 0
        %vm379 = vcmask 1043456
        %v381 = vsel %vm379, %v375, 0
        %383 = vmatprep.subr.bf16.mxu0 0
        %384 = vmatpush1.bf16.msra.mxu0 0
        %385 = vmatprep.subr.bf16.mxu0 0
        %386 = vmatpush1.bf16.msra.mxu0 0
        %387 = vmatprep.subr.bf16.mxu0 0
        %388 = vmatpush1.bf16.msra.mxu0 0
        %389 = vmatprep.subr.bf16.mxu0 0
        %390 = vmatpush1.bf16.msra.mxu0 0
        %391 = vmatprep.subr.bf16.mxu0 0
        %392 = vmatpush1.bf16.msra.mxu0 0
        %393 = vmatprep.subr.bf16.mxu0 0
        %394 = vmatpush1.bf16.msra.mxu0 0
        %395 = vmatprep.subr.bf16.mxu0 0
        %396 = vmatpush1.bf16.msra.mxu0 0
        %397 = vmatprep.subr.bf16.mxu0 0
        %398 = vmatpush1.bf16.msra.mxu0 %v381
        %399 = vmatprep.subr.bf16.mxu0 0
        %400 = vmatpush2.bf16.msra.mxu0 0
        %401 = vmatprep.subr.bf16.mxu0 0
        %402 = vmatpush2.bf16.msra.mxu0 0
        %403 = vmatprep.subr.bf16.mxu0 0
        %404 = vmatpush2.bf16.msra.mxu0 0
        %405 = vmatprep.subr.bf16.mxu0 0
        %406 = vmatpush2.bf16.msra.mxu0 0
        %407 = vmatprep.subr.bf16.mxu0 0
        %408 = vmatpush2.bf16.msra.mxu0 0
        %409 = vmatprep.subr.bf16.mxu0 0
        %410 = vmatpush2.bf16.msra.mxu0 0
        %411 = vmatprep.subr.bf16.mxu0 0
        %412 = vmatpush2.bf16.msra.mxu0 0
        %413 = vmatprep.subr.bf16.mxu0 0
        %414 = vmatpush2.bf16.msra.mxu0 0
        %415 = vmatprep.mubr.bf16.mxu0 0
        %416 = vmatmul.mubr.bf16.gmra.mxu0 %v377
        %v417 = vpop.f32.mrf.mxu0
        %v418 = vadd.f32 0.0, %v417
        %v419 = vpop.f32.mrf.mxu0
        %v420 = vpop.f32.mrf.mxu0
        %v421 = vpop.f32.mrf.mxu0
        %422 = vdwg.mxu0
        %v423 = vpack.c.bf16 %v418, %v418
        %vm424 = vcmask 60416
        %425 = vst.msk [vmem:[#allocation2] sm:$0xf] %vm424, %v423
        %426 = vrot.lane.b32.xlu0 %v305, 120
        %v427 = vpop.permute.xlu0 %426
        %428 = vrot.lane.b32.xlu0 %v305, 88
        %v429 = vpop.permute.xlu0 %428
        %v431 = vsel %vm314, %v427, 0
        %v434 = vsel %vm314, %v429, 0
        %436 = vmatprep.subr.bf16.mxu0 0
        %437 = vmatpush1.bf16.xpose.msra.mxu0 0
        %438 = vmatprep.subr.bf16.mxu0 0
        %439 = vmatpush1.bf16.xpose.msra.mxu0 0
        %440 = vmatprep.subr.bf16.mxu0 0
        %441 = vmatpush1.bf16.xpose.msra.mxu0 0
        %442 = vmatprep.subr.bf16.mxu0 0
        %443 = vmatpush1.bf16.xpose.msra.mxu0 0
        %444 = vmatprep.subr.bf16.mxu0 0
        %445 = vmatpush1.bf16.xpose.msra.mxu0 0
        %446 = vmatprep.subr.bf16.mxu0 0
        %447 = vmatpush1.bf16.xpose.msra.mxu0 0
        %448 = vmatprep.subr.bf16.mxu0 0
        %449 = vmatpush1.bf16.xpose.msra.mxu0 0
        %450 = vmatprep.subr.bf16.mxu0 0
        %451 = vmatpush1.bf16.xpose.msra.mxu0 %v434
        %452 = vmatprep.subr.bf16.mxu0 0
        %453 = vmatpush2.bf16.xpose.msra.mxu0 0
        %454 = vmatprep.subr.bf16.mxu0 0
        %455 = vmatpush2.bf16.xpose.msra.mxu0 0
        %456 = vmatprep.subr.bf16.mxu0 0
        %457 = vmatpush2.bf16.xpose.msra.mxu0 0
        %458 = vmatprep.subr.bf16.mxu0 0
        %459 = vmatpush2.bf16.xpose.msra.mxu0 0
        %460 = vmatprep.subr.bf16.mxu0 0
        %461 = vmatpush2.bf16.xpose.msra.mxu0 0
        %462 = vmatprep.subr.bf16.mxu0 0
        %463 = vmatpush2.bf16.xpose.msra.mxu0 0
        %464 = vmatprep.subr.bf16.mxu0 0
        %465 = vmatpush2.bf16.xpose.msra.mxu0 0
        %466 = vmatprep.subr.bf16.mxu0 0
        %467 = vmatpush2.bf16.xpose.msra.mxu0 0
        %468 = vmatprep.mubr.bf16.mxu0 0
        %469 = vmatmul.mubr.bf16.gmra.mxu0 %v431
        %v470 = vpop.f32.mrf.mxu0
        %v471 = vadd.f32 0.0, %v470
        %v472 = vpop.f32.mrf.mxu0
        %v473 = vpop.f32.mrf.mxu0
        %v474 = vpop.f32.mrf.mxu0
        %475 = vdwg.mxu0
        %v476 = vsel %vm310, %v471, -inf
        %v477 = vsel %vm314, %v476, -inf
        %478 = vmax.xlane.f32.xlu0 %v477
        %v479 = vpop.xlane.xlu0 %478
        %v480 = vsub.f32 %v476, %v479
        %v481 = vmul.f32 %v480, 1.442695
        %v482 = vpow.pop %v481
        %v483 = vsel %vm314, %v482, 0.0
        %484 = vadd.xlane.f32.xlu0 %v483
        %v485 = vpop.xlane.xlu0 %484
        %v486 = vrcp.pop %v485
        %v487 = vmul.f32 %v482, %v486
        %v488 = vpack.c.bf16 %v487, %v487
        %489 = vrot.lane.b32.xlu0 %v305, 56
        %v490 = vpop.permute.xlu0 %489
        %v492 = vsel %vm314, %v488, 0
        %v495 = vsel %vm379, %v490, 0
        %497 = vmatprep.subr.bf16.mxu0 0
        %498 = vmatpush1.bf16.msra.mxu0 0
        %499 = vmatprep.subr.bf16.mxu0 0
        %500 = vmatpush1.bf16.msra.mxu0 0
        %501 = vmatprep.subr.bf16.mxu0 0
        %502 = vmatpush1.bf16.msra.mxu0 0
        %503 = vmatprep.subr.bf16.mxu0 0
        %504 = vmatpush1.bf16.msra.mxu0 0
        %505 = vmatprep.subr.bf16.mxu0 0
        %506 = vmatpush1.bf16.msra.mxu0 0
        %507 = vmatprep.subr.bf16.mxu0 0
        %508 = vmatpush1.bf16.msra.mxu0 0
        %509 = vmatprep.subr.bf16.mxu0 0
        %510 = vmatpush1.bf16.msra.mxu0 0
        %511 = vmatprep.subr.bf16.mxu0 0
        %512 = vmatpush1.bf16.msra.mxu0 %v495
        %513 = vmatprep.subr.bf16.mxu0 0
        %514 = vmatpush2.bf16.msra.mxu0 0
        %515 = vmatprep.subr.bf16.mxu0 0
        %516 = vmatpush2.bf16.msra.mxu0 0
        %517 = vmatprep.subr.bf16.mxu0 0
        %518 = vmatpush2.bf16.msra.mxu0 0
        %519 = vmatprep.subr.bf16.mxu0 0
        %520 = vmatpush2.bf16.msra.mxu0 0
        %521 = vmatprep.subr.bf16.mxu0 0
        %522 = vmatpush2.bf16.msra.mxu0 0
        %523 = vmatprep.subr.bf16.mxu0 0
        %524 = vmatpush2.bf16.msra.mxu0 0
        %525 = vmatprep.subr.bf16.mxu0 0
        %526 = vmatpush2.bf16.msra.mxu0 0
        %527 = vmatprep.subr.bf16.mxu0 0
        %528 = vmatpush2.bf16.msra.mxu0 0
        %529 = vmatprep.mubr.bf16.mxu0 0
        %530 = vmatmul.mubr.bf16.gmra.mxu0 %v492
        %v531 = vpop.f32.mrf.mxu0
        %v532 = vadd.f32 0.0, %v531
        %v533 = vpop.f32.mrf.mxu0
        %v534 = vpop.f32.mrf.mxu0
        %v535 = vpop.f32.mrf.mxu0
        %536 = vdwg.mxu0
        %v537 = vpack.c.bf16 %v532, %v532
        %v539 = vunpack.c.l.b16 %v537
        %v540 = vpack.c.b16 %v539, %v539
        %541 = vrot.lane.b32.xlu0 %v540, 8
        %v542 = vpop.permute.xlu0 %541
        %vm544 = vcmask 126016
        %545 = vst.msk [vmem:[#allocation2] sm:$0xf] %vm544, %v542
        %546 = vrot.lane.b32.xlu0 %v305, 112
        %v547 = vpop.permute.xlu0 %546
        %548 = vrot.lane.b32.xlu0 %v305, 80
        %v549 = vpop.permute.xlu0 %548
        %v551 = vsel %vm314, %v547, 0
        %v554 = vsel %vm314, %v549, 0
        %556 = vmatprep.subr.bf16.mxu0 0
        %557 = vmatpush1.bf16.xpose.msra.mxu0 0
        %558 = vmatprep.subr.bf16.mxu0 0
        %559 = vmatpush1.bf16.xpose.msra.mxu0 0
        %560 = vmatprep.subr.bf16.mxu0 0
        %561 = vmatpush1.bf16.xpose.msra.mxu0 0
        %562 = vmatprep.subr.bf16.mxu0 0
        %563 = vmatpush1.bf16.xpose.msra.mxu0 0
        %564 = vmatprep.subr.bf16.mxu0 0
        %565 = vmatpush1.bf16.xpose.msra.mxu0 0
        %566 = vmatprep.subr.bf16.mxu0 0
        %567 = vmatpush1.bf16.xpose.msra.mxu0 0
        %568 = vmatprep.subr.bf16.mxu0 0
        %569 = vmatpush1.bf16.xpose.msra.mxu0 0
        %570 = vmatprep.subr.bf16.mxu0 0
        %571 = vmatpush1.bf16.xpose.msra.mxu0 %v554
        %572 = vmatprep.subr.bf16.mxu0 0
        %573 = vmatpush2.bf16.xpose.msra.mxu0 0
        %574 = vmatprep.subr.bf16.mxu0 0
        %575 = vmatpush2.bf16.xpose.msra.mxu0 0
        %576 = vmatprep.subr.bf16.mxu0 0
        %577 = vmatpush2.bf16.xpose.msra.mxu0 0
        %578 = vmatprep.subr.bf16.mxu0 0
        %579 = vmatpush2.bf16.xpose.msra.mxu0 0
        %580 = vmatprep.subr.bf16.mxu0 0
        %581 = vmatpush2.bf16.xpose.msra.mxu0 0
        %582 = vmatprep.subr.bf16.mxu0 0
        %583 = vmatpush2.bf16.xpose.msra.mxu0 0
        %584 = vmatprep.subr.bf16.mxu0 0
        %585 = vmatpush2.bf16.xpose.msra.mxu0 0
        %586 = vmatprep.subr.bf16.mxu0 0
        %587 = vmatpush2.bf16.xpose.msra.mxu0 0
        %588 = vmatprep.mubr.bf16.mxu0 0
        %589 = vmatmul.mubr.bf16.gmra.mxu0 %v551
        %v590 = vpop.f32.mrf.mxu0
        %v591 = vadd.f32 0.0, %v590
        %v592 = vpop.f32.mrf.mxu0
        %v593 = vpop.f32.mrf.mxu0
        %v594 = vpop.f32.mrf.mxu0
        %595 = vdwg.mxu0
        %v596 = vsel %vm310, %v591, -inf
        %v597 = vsel %vm314, %v596, -inf
        %598 = vmax.xlane.f32.xlu0 %v597
        %v599 = vpop.xlane.xlu0 %598
        %v600 = vsub.f32 %v596, %v599
        %v601 = vmul.f32 %v600, 1.442695
        %v602 = vpow.pop %v601
        %v603 = vsel %vm314, %v602, 0.0
        %604 = vadd.xlane.f32.xlu0 %v603
        %v605 = vpop.xlane.xlu0 %604
        %v606 = vrcp.pop %v605
        %v607 = vmul.f32 %v602, %v606
        %v608 = vpack.c.bf16 %v607, %v607
        %609 = vrot.lane.b32.xlu0 %v305, 48
        %v610 = vpop.permute.xlu0 %609
        %v612 = vsel %vm314, %v608, 0
        %v615 = vsel %vm379, %v610, 0
        %617 = vmatprep.subr.bf16.mxu0 0
        %618 = vmatpush1.bf16.msra.mxu0 0
        %619 = vmatprep.subr.bf16.mxu0 0
        %620 = vmatpush1.bf16.msra.mxu0 0
        %621 = vmatprep.subr.bf16.mxu0 0
        %622 = vmatpush1.bf16.msra.mxu0 0
        %623 = vmatprep.subr.bf16.mxu0 0
        %624 = vmatpush1.bf16.msra.mxu0 0
        %625 = vmatprep.subr.bf16.mxu0 0
        %626 = vmatpush1.bf16.msra.mxu0 0
        %627 = vmatprep.subr.bf16.mxu0 0
        %628 = vmatpush1.bf16.msra.mxu0 0
        %629 = vmatprep.subr.bf16.mxu0 0
        %630 = vmatpush1.bf16.msra.mxu0 0
        %631 = vmatprep.subr.bf16.mxu0 0
        %632 = vmatpush1.bf16.msra.mxu0 %v615
        %633 = vmatprep.subr.bf16.mxu0 0
        %634 = vmatpush2.bf16.msra.mxu0 0
        %635 = vmatprep.subr.bf16.mxu0 0
        %636 = vmatpush2.bf16.msra.mxu0 0
        %637 = vmatprep.subr.bf16.mxu0 0
        %638 = vmatpush2.bf16.msra.mxu0 0
        %639 = vmatprep.subr.bf16.mxu0 0
        %640 = vmatpush2.bf16.msra.mxu0 0
        %641 = vmatprep.subr.bf16.mxu0 0
        %642 = vmatpush2.bf16.msra.mxu0 0
        %643 = vmatprep.subr.bf16.mxu0 0
        %644 = vmatpush2.bf16.msra.mxu0 0
        %645 = vmatprep.subr.bf16.mxu0 0
        %646 = vmatpush2.bf16.msra.mxu0 0
        %647 = vmatprep.subr.bf16.mxu0 0
        %648 = vmatpush2.bf16.msra.mxu0 0
        %649 = vmatprep.mubr.bf16.mxu0 0
        %650 = vmatmul.mubr.bf16.gmra.mxu0 %v612
        %v651 = vpop.f32.mrf.mxu0
        %v652 = vadd.f32 0.0, %v651
        %v653 = vpop.f32.mrf.mxu0
        %v654 = vpop.f32.mrf.mxu0
        %v655 = vpop.f32.mrf.mxu0
        %656 = vdwg.mxu0
        %v657 = vpack.c.bf16 %v652, %v652
        %v659 = vunpack.c.l.b16 %v657
        %v660 = vpack.c.b16 %v659, %v659
        %661 = vrot.lane.b32.xlu0 %v660, 16
        %v662 = vpop.permute.xlu0 %661
        %vm664 = vcmask 191616
        %665 = vst.msk [vmem:[#allocation2] sm:$0xf] %vm664, %v662
        %666 = vrot.lane.b32.xlu0 %v305, 104
        %v667 = vpop.permute.xlu0 %666
        %668 = vrot.lane.b32.xlu0 %v305, 72
        %v669 = vpop.permute.xlu0 %668
        %v671 = vsel %vm314, %v667, 0
        %v674 = vsel %vm314, %v669, 0
        %676 = vmatprep.subr.bf16.mxu0 0
        %677 = vmatpush1.bf16.xpose.msra.mxu0 0
        %678 = vmatprep.subr.bf16.mxu0 0
        %679 = vmatpush1.bf16.xpose.msra.mxu0 0
        %680 = vmatprep.subr.bf16.mxu0 0
        %681 = vmatpush1.bf16.xpose.msra.mxu0 0
        %682 = vmatprep.subr.bf16.mxu0 0
        %683 = vmatpush1.bf16.xpose.msra.mxu0 0
        %684 = vmatprep.subr.bf16.mxu0 0
        %685 = vmatpush1.bf16.xpose.msra.mxu0 0
        %686 = vmatprep.subr.bf16.mxu0 0
        %687 = vmatpush1.bf16.xpose.msra.mxu0 0
        %688 = vmatprep.subr.bf16.mxu0 0
        %689 = vmatpush1.bf16.xpose.msra.mxu0 0
        %690 = vmatprep.subr.bf16.mxu0 0
        %691 = vmatpush1.bf16.xpose.msra.mxu0 %v674
        %692 = vmatprep.subr.bf16.mxu0 0
        %693 = vmatpush2.bf16.xpose.msra.mxu0 0
        %694 = vmatprep.subr.bf16.mxu0 0
        %695 = vmatpush2.bf16.xpose.msra.mxu0 0
        %696 = vmatprep.subr.bf16.mxu0 0
        %697 = vmatpush2.bf16.xpose.msra.mxu0 0
        %698 = vmatprep.subr.bf16.mxu0 0
        %699 = vmatpush2.bf16.xpose.msra.mxu0 0
        %700 = vmatprep.subr.bf16.mxu0 0
        %701 = vmatpush2.bf16.xpose.msra.mxu0 0
        %702 = vmatprep.subr.bf16.mxu0 0
        %703 = vmatpush2.bf16.xpose.msra.mxu0 0
        %704 = vmatprep.subr.bf16.mxu0 0
        %705 = vmatpush2.bf16.xpose.msra.mxu0 0
        %706 = vmatprep.subr.bf16.mxu0 0
        %707 = vmatpush2.bf16.xpose.msra.mxu0 0
        %708 = vmatprep.mubr.bf16.mxu0 0
        %709 = vmatmul.mubr.bf16.gmra.mxu0 %v671
        %v710 = vpop.f32.mrf.mxu0
        %v711 = vadd.f32 0.0, %v710
        %v712 = vpop.f32.mrf.mxu0
        %v713 = vpop.f32.mrf.mxu0
        %v714 = vpop.f32.mrf.mxu0
        %715 = vdwg.mxu0
        %v716 = vsel %vm310, %v711, -inf
        %v717 = vsel %vm314, %v716, -inf
        %718 = vmax.xlane.f32.xlu0 %v717
        %v719 = vpop.xlane.xlu0 %718
        %v720 = vsub.f32 %v716, %v719
        %v721 = vmul.f32 %v720, 1.442695
        %v722 = vpow.pop %v721
        %v723 = vsel %vm314, %v722, 0.0
        %724 = vadd.xlane.f32.xlu0 %v723
        %v725 = vpop.xlane.xlu0 %724
        %v726 = vrcp.pop %v725
        %v727 = vmul.f32 %v722, %v726
        %v728 = vpack.c.bf16 %v727, %v727
        %729 = vrot.lane.b32.xlu0 %v305, 40
        %v730 = vpop.permute.xlu0 %729
        %v732 = vsel %vm314, %v728, 0
        %v735 = vsel %vm379, %v730, 0
        %737 = vmatprep.subr.bf16.mxu0 0
        %738 = vmatpush1.bf16.msra.mxu0 0
        %739 = vmatprep.subr.bf16.mxu0 0
        %740 = vmatpush1.bf16.msra.mxu0 0
        %741 = vmatprep.subr.bf16.mxu0 0
        %742 = vmatpush1.bf16.msra.mxu0 0
        %743 = vmatprep.subr.bf16.mxu0 0
        %744 = vmatpush1.bf16.msra.mxu0 0
        %745 = vmatprep.subr.bf16.mxu0 0
        %746 = vmatpush1.bf16.msra.mxu0 0
        %747 = vmatprep.subr.bf16.mxu0 0
        %748 = vmatpush1.bf16.msra.mxu0 0
        %749 = vmatprep.subr.bf16.mxu0 0
        %750 = vmatpush1.bf16.msra.mxu0 0
        %751 = vmatprep.subr.bf16.mxu0 0
        %752 = vmatpush1.bf16.msra.mxu0 %v735
        %753 = vmatprep.subr.bf16.mxu0 0
        %754 = vmatpush2.bf16.msra.mxu0 0
        %755 = vmatprep.subr.bf16.mxu0 0
        %756 = vmatpush2.bf16.msra.mxu0 0
        %757 = vmatprep.subr.bf16.mxu0 0
        %758 = vmatpush2.bf16.msra.mxu0 0
        %759 = vmatprep.subr.bf16.mxu0 0
        %760 = vmatpush2.bf16.msra.mxu0 0
        %761 = vmatprep.subr.bf16.mxu0 0
        %762 = vmatpush2.bf16.msra.mxu0 0
        %763 = vmatprep.subr.bf16.mxu0 0
        %764 = vmatpush2.bf16.msra.mxu0 0
        %765 = vmatprep.subr.bf16.mxu0 0
        %766 = vmatpush2.bf16.msra.mxu0 0
        %767 = vmatprep.subr.bf16.mxu0 0
        %768 = vmatpush2.bf16.msra.mxu0 0
        %769 = vmatprep.mubr.bf16.mxu0 0
        %770 = vmatmul.mubr.bf16.gmra.mxu0 %v732
        %v771 = vpop.f32.mrf.mxu0
        %v772 = vadd.f32 0.0, %v771
        %v773 = vpop.f32.mrf.mxu0
        %v774 = vpop.f32.mrf.mxu0
        %v775 = vpop.f32.mrf.mxu0
        %776 = vdwg.mxu0
        %v777 = vpack.c.bf16 %v772, %v772
        %v779 = vunpack.c.l.b16 %v777
        %v780 = vpack.c.b16 %v779, %v779
        %781 = vrot.lane.b32.xlu0 %v780, 24
        %v782 = vpop.permute.xlu0 %781
        %vm784 = vcmask 257216
        %785 = vst.msk [vmem:[#allocation2] sm:$0xf] %vm784, %v782
        %v786 = vld [vmem:[#allocation2] sm:$0xf]
        %v787 = vld [vmem:[#allocation8] sm:$0xf]
        %v788 = vld [vmem:[#allocation8 + $0x4] sm:$0xf]
        %v789 = vld [vmem:[#allocation8 + $0x8] sm:$0xf]
        %v790 = vld [vmem:[#allocation8 + $0xc] sm:$0xf]
        %v791 = vld [vmem:[%s3] sm:$0x1]
        %v793 = vlaneseq
        %v794 = vshrl.u32 %v793, 7
        %v795 = vsub.s32 0, %v794
        %v796 = vrot.slane %v791, %v795
        %v802 = vunpack.c.l.b16 %v787
        %v803 = vunpack.c.l.b16 %v788
        %v804 = vunpack.c.l.b16 %v789
        %v805 = vunpack.c.l.b16 %v790
        %v806 = vpack.c.b16 %v803, %v802
        %v807 = vpack.c.b16 %v805, %v804
        %v811 = vsel %vm261, %v786, 0
        %813 = vmatprep.subr.bf16.mxu0 0
        %814 = vmatpush1.bf16.msra.mxu0 0
        %815 = vmatprep.subr.bf16.mxu0 0
        %816 = vmatpush1.bf16.msra.mxu0 0
        %817 = vmatprep.subr.bf16.mxu0 0
        %818 = vmatpush1.bf16.msra.mxu0 0
        %819 = vmatprep.subr.bf16.mxu0 0
        %820 = vmatpush1.bf16.msra.mxu0 0
        %821 = vmatprep.subr.bf16.mxu0 0
        %822 = vmatpush1.bf16.msra.mxu0 0
        %823 = vmatprep.subr.bf16.mxu0 0
        %824 = vmatpush1.bf16.msra.mxu0 0
        %825 = vmatprep.subr.bf16.mxu0 0
        %826 = vmatpush1.bf16.msra.mxu0 %v807
        %827 = vmatprep.subr.bf16.mxu0 0
        %828 = vmatpush1.bf16.msra.mxu0 %v806
        %829 = vmatprep.subr.bf16.mxu0 0
        %830 = vmatpush2.bf16.msra.mxu0 0
        %831 = vmatprep.subr.bf16.mxu0 0
        %832 = vmatpush2.bf16.msra.mxu0 0
        %833 = vmatprep.subr.bf16.mxu0 0
        %834 = vmatpush2.bf16.msra.mxu0 0
        %835 = vmatprep.subr.bf16.mxu0 0
        %836 = vmatpush2.bf16.msra.mxu0 0
        %837 = vmatprep.subr.bf16.mxu0 0
        %838 = vmatpush2.bf16.msra.mxu0 0
        %839 = vmatprep.subr.bf16.mxu0 0
        %840 = vmatpush2.bf16.msra.mxu0 0
        %841 = vmatprep.subr.bf16.mxu0 0
        %842 = vmatpush2.bf16.msra.mxu0 0
        %843 = vmatprep.subr.bf16.mxu0 0
        %844 = vmatpush2.bf16.msra.mxu0 0
        %845 = vmatprep.mubr.bf16.mxu0 0
        %846 = vmatmul.mubr.bf16.gmra.mxu0 %v811
        %v847 = vpop.f32.mrf.mxu0
        %v848 = vadd.f32 %v796, %v847
        %v849 = vpop.f32.mrf.mxu0
        %v850 = vpop.f32.mrf.mxu0
        %v851 = vpop.f32.mrf.mxu0
        %852 = vdwg.mxu0
        %853 = vst.msk [vmem:[%s241] sm:$0xff] %vm261, %v848
        %s854 = sand.u32 %s119, 1
        %s855 = scalar_lea.sflag [#allocation5], %s854
        %s856 = sand.u32 %s119, 1
        %s857 = smul.addr %s856, 8
        %s858 = scalar_lea.vmem [#allocation9], %s857
        // Predicated region
        $region49: #{tpu_custom_call.1} parent=35 // pred_check
          %p859 = pneg %p129
        $region50: #{tpu_custom_call.1} parent=35 // pred_check_branch
          %861 = sbr.rel (%p859) target = $region52
        $region51: #{tpu_custom_call.1} parent=35 // pred_region
          %s863 = ssub.s32 128, 128
          %864 = vsyncadd %s855, %s863
          %s865 = smul.addr %s22, 128
          %s866 = scalar_lea.hbm %s4, %s865
          %s868 = sshll.u32 %s858, 4
          %s869 = int_to_ptr.vmem [resolvable:$true] %s868
          %871 = dma.vmem_to_hbm [thread:$0]  %s869, 128, %s866, %s855
        $region52: #{tpu_custom_call.1} parent=35 // pred_fallthru
          _
      $region36: #{tpu_custom_call.1} parent=5 // pred_fallthru
        _
      %p872 = scmp.le.s32.totalorder 2, %s17
      // Predicated region
      $region53: #{tpu_custom_call.1} parent=5 // pred_check
        %p873 = pneg %p872
      $region54: #{tpu_custom_call.1} parent=5 // pred_check_branch
        %875 = sbr.rel (%p873) target = $region56
      $region55: #{tpu_custom_call.1} parent=5 // pred_region
        %s876 = ssub.s32 %s17, 2
        // Predicated region
        $region57: #{tpu_custom_call.1} parent=55 // pred_check
          %p877 = pneg %p135
        $region58: #{tpu_custom_call.1} parent=55 // pred_check_branch
          %879 = sbr.rel (%p877) target = $region60
        $region59: #{tpu_custom_call.1} parent=55 // pred_region
          %s880 = sand.u32 %s120, 1
          %s881 = scalar_lea.sflag [#allocation5], %s880
          %s882 = sand.u32 %s120, 1
          %s883 = smul.addr %s882, 8
          %s884 = scalar_lea.vmem [#allocation9], %s883
          %885 = dma.done %s881, 128
        $region60: #{tpu_custom_call.1} parent=55 // pred_fallthru
          _
      $region56: #{tpu_custom_call.1} parent=5 // pred_fallthru
        _
    $region6: #{tpu_custom_call.1} parent=1 // loop_footer
      %s21 = sadd.s32 1, %s17
    $region7: #{tpu_custom_call.1} parent=1 // loop_footer_branch
      %16 = sbr.rel target = $region3
    $region8: #{tpu_custom_call.1} parent=1 // loop_exit
      _
    %886 = vsyncpa [#allocation4], 1
    %s887 = scalar_lea.sflag [#allocation4], 1
    %888 = vsyncpa %s887, 1
    %889 = vsyncpa [#allocation7], 1
    %890 = vsyncpa [#allocation5], 1
    %s891 = scalar_lea.sflag [#allocation5], 1
    %892 = vsyncpa %s891, 1

// kernel: tpu_custom_call.1
$region0: #{tpu_custom_call.1}
  #allocation0 [shape = 'u32[]', space=smem, size = 0x4, offset = 0x4, fixed_abs, tag = 'smem constant byte address 0x4 - core index']
  #allocation1 [shape = 'u32[144,128]{1,0:T(1,128)}', space=vmem, size = 0x12000, scoped, tag = 'internal scratch']
  #allocation2 [shape = 'bf16[8,32]{1,0:T(8,128)(2,1)}', space=vmem, size = 0x800, scoped, tag = 'scratch operand']
  %s0 = inlined_call_operand.hbm [shape: f32[2,8,32], index: 0, kind: input, shape index: {}]
  %s1 = inlined_call_operand.hbm [shape: bf16[32,96], index: 1, kind: input, shape index: {}]
  %s2 = inlined_call_operand.hbm [shape: bf16[32,32], index: 2, kind: input, shape index: {}]
  %s3 = inlined_call_operand.vmem [shape: f32[1,32], index: 3, kind: input, shape index: {}]
  %s4 = inlined_call_operand.hbm [shape: f32[2,8,32], index: 4, kind: output, shape index: {}]
  %s5 = sld [smem:[#allocation0]]
  $region61: #{tpu_custom_call.1} parent=0
    _
  %s7 = ssub.s32 1, %s5
  %s8 = scalar_select 0, %s7, %s5
  $region1: #{tpu_custom_call.1} parent=0
    #allocation3 [shape = 'u8[8192]{0}', space=vmem, size = 0x2000, scoped, tag = 'input window, operand 0']
    #allocation4 [shape = 's32[2]{0}', space=sflag, size = 0x8, scoped, tag = 'scoped memory for tpu_custom_call.1']
    #allocation5 [shape = 's32[2]{0}', space=sflag, size = 0x8, scoped, tag = 'scoped memory for tpu_custom_call.1']
    #allocation6 [shape = 'u8[8192]{0}', space=vmem, size = 0x2000, scoped, tag = 'input window, operand 1, single buffered']
    #allocation7 [shape = 's32[1]{0}', space=sflag, size = 0x4, scoped, tag = 'scoped memory for tpu_custom_call.1']
    #allocation8 [shape = 'u8[8192]{0}', space=vmem, size = 0x2000, scoped, tag = 'input window, operand 2, single buffered']
    #allocation9 [shape = 'u8[8192]{0}', space=vmem, size = 0x2000, scoped, tag = 'output window, operand 0']
    %9 = vsyncpa [#allocation4], 0
    %s10 = scalar_lea.sflag [#allocation4], 1
    %11 = vsyncpa %s10, 0
    %12 = vsyncpa [#allocation7], 0
    %13 = vsyncpa [#allocation5], 0
    %s14 = scalar_lea.sflag [#allocation5], 1
    %15 = vsyncpa %s14, 0
    loop: start=0, step=1, limit=4
    $region2: #{tpu_custom_call.1} parent=1 // loop_pre_header
      _
    $region3: #{tpu_custom_call.1} parent=1 // loop_header
      %s17 = sphi 0, %s21
      %p18 = scmp.ge.s32.totalorder %s17, 4
      %s27 = sphi 0, %s29
      %s30 = sphi 0, %s27
      %s31 = sphi 0, %s30
      %s47 = sphi 0, %s31
      %s51 = sphi 0, %s51
      %s53 = sphi 0, %s51
      %s54 = sphi 0, %s53
      %s68 = sphi 0, %s54
      %s72 = sphi 0, %s72
      %s74 = sphi 0, %s72
      %s75 = sphi 0, %s74
      %s89 = sphi 0, %s75
      %s93 = sphi 0, %s93
      %s95 = sphi 0, %s93
      %s96 = sphi 0, %s95
      %s110 = sphi 0, %s96
      %s116 = sphi 0, %s118
      %s119 = sphi 0, %s116
      %s120 = sphi 0, %s119
      %s136 = sphi 0, %s120
    $region4: #{tpu_custom_call.1} parent=1 // loop_header_branch
      %20 = sbr.rel (%p18) target = $region8
    $region5: #{tpu_custom_call.1} parent=1 // loop_body
      %s22 = ssub.s32 %s17, 1
      %s23 = ssub.s32 %s17, 2
      %s24 = sadd.s32 %s17, 1
      %s25 = ssub.s32 %s17, %s24
      %p26 = scmp.eq.s32.totalorder %s25, 0
      %s28 = sadd.s32 %s27, 1
      %s29 = scalar_select %p26, %s27, %s28
      %p32 = pneg %p26
      %p33 = scmp.eq.s32.totalorder %s17, 1
      %p34 = por %p32, %p33
      %p35 = scmp.ne.s32.totalorder %s27, %s30
      %p36 = scmp.eq.s32.totalorder %s17, 0
      %p37 = por %p35, %p36
      %p38 = scmp.ne.s32.totalorder %s27, %s30
      %p39 = scmp.eq.s32.totalorder %s22, 1
      %p40 = por %p38, %p39
      %p41 = scmp.ne.s32.totalorder %s30, %s31
      %p42 = scmp.eq.s32.totalorder %s22, 0
      %p43 = por %p41, %p42
      %p44 = scmp.ne.s32.totalorder %s30, %s31
      %p45 = scmp.eq.s32.totalorder %s23, 1
      %p46 = por %p44, %p45
      %p48 = scmp.ne.s32.totalorder %s31, %s47
      %p49 = scmp.eq.s32.totalorder %s23, 0
      %p50 = por %p48, %p49
      %s52 = sadd.s32 %s51, 1
      %p55 = scmp.eq.s32.totalorder %s17, 1
      %p56 = scmp.ne.s32.totalorder %s51, %s53
      %p57 = scmp.eq.s32.totalorder %s17, 0
      %p58 = por %p56, %p57
      %p59 = scmp.ne.s32.totalorder %s51, %s53
      %p60 = scmp.eq.s32.totalorder %s22, 1
      %p61 = por %p59, %p60
      %p62 = scmp.ne.s32.totalorder %s53, %s54
      %p63 = scmp.eq.s32.totalorder %s22, 0
      %p64 = por %p62, %p63
      %p65 = scmp.ne.s32.totalorder %s53, %s54
      %p66 = scmp.eq.s32.totalorder %s23, 1
      %p67 = por %p65, %p66
      %p69 = scmp.ne.s32.totalorder %s54, %s68
      %p70 = scmp.eq.s32.totalorder %s23, 0
      %p71 = por %p69, %p70
      %s73 = sadd.s32 %s72, 1
      %p76 = scmp.eq.s32.totalorder %s17, 1
      %p77 = scmp.ne.s32.totalorder %s72, %s74
      %p78 = scmp.eq.s32.totalorder %s17, 0
      %p79 = por %p77, %p78
      %p80 = scmp.ne.s32.totalorder %s72, %s74
      %p81 = scmp.eq.s32.totalorder %s22, 1
      %p82 = por %p80, %p81
      %p83 = scmp.ne.s32.totalorder %s74, %s75
      %p84 = scmp.eq.s32.totalorder %s22, 0
      %p85 = por %p83, %p84
      %p86 = scmp.ne.s32.totalorder %s74, %s75
      %p87 = scmp.eq.s32.totalorder %s23, 1
      %p88 = por %p86, %p87
      %p90 = scmp.ne.s32.totalorder %s75, %s89
      %p91 = scmp.eq.s32.totalorder %s23, 0
      %p92 = por %p90, %p91
      %s94 = sadd.s32 %s93, 1
      %p97 = scmp.eq.s32.totalorder %s17, 1
      %p98 = scmp.ne.s32.totalorder %s93, %s95
      %p99 = scmp.eq.s32.totalorder %s17, 0
      %p100 = por %p98, %p99
      %p101 = scmp.ne.s32.totalorder %s93, %s95
      %p102 = scmp.eq.s32.totalorder %s22, 1
      %p103 = por %p101, %p102
      %p104 = scmp.ne.s32.totalorder %s95, %s96
      %p105 = scmp.eq.s32.totalorder %s22, 0
      %p106 = por %p104, %p105
      %p107 = scmp.ne.s32.totalorder %s95, %s96
      %p108 = scmp.eq.s32.totalorder %s23, 1
      %p109 = por %p107, %p108
      %p111 = scmp.ne.s32.totalorder %s96, %s110
      %p112 = scmp.eq.s32.totalorder %s23, 0
      %p113 = por %p111, %p112
      %s114 = ssub.s32 %s17, %s24
      %p115 = scmp.eq.s32.totalorder %s114, 0
      %s117 = sadd.s32 %s116, 1
      %s118 = scalar_select %p115, %s116, %s117
      %p121 = pneg %p115
      %p122 = scmp.eq.s32.totalorder %s17, 1
      %p123 = por %p121, %p122
      %p124 = scmp.ne.s32.totalorder %s116, %s119
      %p125 = scmp.eq.s32.totalorder %s17, 0
      %p126 = por %p124, %p125
      %p127 = scmp.ne.s32.totalorder %s116, %s119
      %p128 = scmp.eq.s32.totalorder %s22, 1
      %p129 = por %p127, %p128
      %p130 = scmp.ne.s32.totalorder %s119, %s120
      %p131 = scmp.eq.s32.totalorder %s22, 0
      %p132 = por %p130, %p131
      %p133 = scmp.ne.s32.totalorder %s119, %s120
      %p134 = scmp.eq.s32.totalorder %s23, 1
      %p135 = por %p133, %p134
      %p137 = scmp.ne.s32.totalorder %s120, %s136
      %p138 = scmp.eq.s32.totalorder %s23, 0
      %p139 = por %p137, %p138
      %p140 = scmp.le.s32.totalorder 1, %s17
      %p141 = scmp.lt.s32.totalorder %s17, 3
      %p142 = pnand %p140, %p141
      %p143 = pneg %p142
      // Predicated region
      $region9: #{tpu_custom_call.1} parent=5 // pred_check
        _
      $region10: #{tpu_custom_call.1} parent=5 // pred_check_branch
        %145 = sbr.rel (%p142) target = $region12
      $region11: #{tpu_custom_call.1} parent=5 // pred_region
        %s146 = ssub.s32 %s17, 1
        // Predicated region
        $region13: #{tpu_custom_call.1} parent=11 // pred_check
          %p147 = pneg %p64
        $region14: #{tpu_custom_call.1} parent=11 // pred_check_branch
          %149 = sbr.rel (%p147) target = $region16
        $region15: #{tpu_custom_call.1} parent=11 // pred_region
          %s151 = ssub.s32 256, 256
          %152 = vsyncadd [#allocation7], %s151
          %s153 = sshll.u32 [#allocation6], 4
          %s154 = int_to_ptr.vmem [resolvable:$true] %s153
          %159 = dma.hbm_to_vmem [thread:$0]  %s1, 256, %s154, [#allocation7], 64, 64, 4
        $region16: #{tpu_custom_call.1} parent=11 // pred_fallthru
          _
        // Predicated region
        $region17: #{tpu_custom_call.1} parent=11 // pred_check
          %p160 = pneg %p85
        $region18: #{tpu_custom_call.1} parent=11 // pred_check_branch
          %162 = sbr.rel (%p160) target = $region20
        $region19: #{tpu_custom_call.1} parent=11 // pred_region
          %s164 = ssub.s32 256, 256
          %165 = vsyncadd [#allocation7], %s164
          %s166 = sshll.u32 [#allocation8], 4
          %s167 = int_to_ptr.vmem [resolvable:$true] %s166
          %172 = dma.hbm_to_vmem [thread:$0]  %s2, 256, %s167, [#allocation7], 64, 64, 4
        $region20: #{tpu_custom_call.1} parent=11 // pred_fallthru
          _
        // Predicated region
        $region21: #{tpu_custom_call.1} parent=11 // pred_check
          %p173 = pneg %p106
        $region22: #{tpu_custom_call.1} parent=11 // pred_check_branch
          %175 = sbr.rel (%p173) target = $region24
        $region23: #{tpu_custom_call.1} parent=11 // pred_region
          _
        $region24: #{tpu_custom_call.1} parent=11 // pred_fallthru
          _
      $region12: #{tpu_custom_call.1} parent=5 // pred_fallthru
        _
      %p176 = scmp.lt.s32.totalorder %s17, 2
      // Predicated region
      $region25: #{tpu_custom_call.1} parent=5 // pred_check
        %p177 = pneg %p176
      $region26: #{tpu_custom_call.1} parent=5 // pred_check_branch
        %179 = sbr.rel (%p177) target = $region28
      $region27: #{tpu_custom_call.1} parent=5 // pred_region
        // Predicated region
        $region29: #{tpu_custom_call.1} parent=27 // pred_check
          %p180 = pneg %p37
        $region30: #{tpu_custom_call.1} parent=27 // pred_check_branch
          %182 = sbr.rel (%p180) target = $region32
        $region31: #{tpu_custom_call.1} parent=27 // pred_region
          %s183 = sand.u32 %s27, 1
          %s184 = scalar_lea.sflag [#allocation4], %s183
          %s185 = sand.u32 %s27, 1
          %s186 = smul.addr %s185, 8
          %s187 = scalar_lea.vmem [#allocation3], %s186
          %s189 = ssub.s32 128, 128
          %190 = vsyncadd %s184, %s189
          %s191 = smul.addr %s17, 128
          %s192 = scalar_lea.hbm %s0, %s191
          %s194 = sshll.u32 %s187, 4
          %s195 = int_to_ptr.vmem [resolvable:$true] %s194
          %197 = dma.hbm_to_vmem [thread:$0]  %s192, 128, %s195, %s184
        $region32: #{tpu_custom_call.1} parent=27 // pred_fallthru
          _
      $region28: #{tpu_custom_call.1} parent=5 // pred_fallthru
        _
      %p198 = scmp.le.s32.totalorder 1, %s17
      %p199 = scmp.lt.s32.totalorder %s17, 3
      %p200 = pnand %p198, %p199
      %p201 = pneg %p200
      // Predicated region
      $region33: #{tpu_custom_call.1} parent=5 // pred_check
        _
      $region34: #{tpu_custom_call.1} parent=5 // pred_check_branch
        %203 = sbr.rel (%p200) target = $region36
      $region35: #{tpu_custom_call.1} parent=5 // pred_region
        %s204 = ssub.s32 %s17, 1
        %s205 = sand.u32 %s30, 1
        %s206 = scalar_lea.sflag [#allocation4], %s205
        %s207 = sand.u32 %s30, 1
        %s208 = smul.addr %s207, 8
        %s209 = scalar_lea.vmem [#allocation3], %s208
        // Predicated region
        $region37: #{tpu_custom_call.1} parent=35 // pred_check
          %p210 = pneg %p43
        $region38: #{tpu_custom_call.1} parent=35 // pred_check_branch
          %212 = sbr.rel (%p210) target = $region40
        $region39: #{tpu_custom_call.1} parent=35 // pred_region
          %213 = dma.done %s206, 128
        $region40: #{tpu_custom_call.1} parent=35 // pred_fallthru
          _
        // Predicated region
        $region41: #{tpu_custom_call.1} parent=35 // pred_check
          %p214 = pneg %p64
        $region42: #{tpu_custom_call.1} parent=35 // pred_check_branch
          %216 = sbr.rel (%p214) target = $region44
        $region43: #{tpu_custom_call.1} parent=35 // pred_region
          %217 = dma.done [#allocation7], 256
        $region44: #{tpu_custom_call.1} parent=35 // pred_fallthru
          _
        // Predicated region
        $region45: #{tpu_custom_call.1} parent=35 // pred_check
          %p218 = pneg %p85
        $region46: #{tpu_custom_call.1} parent=35 // pred_check_branch
          %220 = sbr.rel (%p218) target = $region48
        $region47: #{tpu_custom_call.1} parent=35 // pred_region
          %221 = dma.done [#allocation7], 256
        $region48: #{tpu_custom_call.1} parent=35 // pred_fallthru
          _
        %s222 = sand.u32 %s30, 1
        %s223 = scalar_lea.sflag [#allocation4], %s222
        %s224 = sand.u32 %s30, 1
        %s225 = smul.addr %s224, 8
        %s226 = scalar_lea.vmem [#allocation3], %s225
        %p227 = pneg %p43
        %p228 = pneg %p40
        %p229 = pneg %p64
        %p230 = pneg %p61
        %p231 = pneg %p85
        %p232 = pneg %p82
        %p233 = pneg %p106
        %p234 = pneg %p103
        %p235 = pneg %p132
        %p236 = pneg %p129
        %s237 = sand.u32 %s119, 1
        %s238 = scalar_lea.sflag [#allocation5], %s237
        %s239 = sand.u32 %s119, 1
        %s240 = smul.addr %s239, 8
        %s241 = scalar_lea.vmem [#allocation9], %s240
        %v243 = vld [vmem:[%s209] sm:$0xff]
        %v244 = vpack.c.bf16 %v243, %v243
        %v245 = vld [vmem:[#allocation6] sm:$0xf]
        %v246 = vld [vmem:[#allocation6 + $0x4] sm:$0xf]
        %v247 = vld [vmem:[#allocation6 + $0x8] sm:$0xf]
        %v248 = vld [vmem:[#allocation6 + $0xc] sm:$0xf]
        %v253 = vunpack.c.l.b16 %v245
        %v254 = vunpack.c.l.b16 %v246
        %v255 = vunpack.c.l.b16 %v247
        %v256 = vunpack.c.l.b16 %v248
        %v257 = vpack.c.b16 %v254, %v253
        %v258 = vpack.c.b16 %v256, %v255
        %vm261 = vcmask 261120
        %v263 = vsel %vm261, %v244, 0
        %265 = vmatprep.subr.bf16.mxu0 0
        %266 = vmatpush1.bf16.msra.mxu0 0
        %267 = vmatprep.subr.bf16.mxu0 0
        %268 = vmatpush1.bf16.msra.mxu0 0
        %269 = vmatprep.subr.bf16.mxu0 0
        %270 = vmatpush1.bf16.msra.mxu0 0
        %271 = vmatprep.subr.bf16.mxu0 0
        %272 = vmatpush1.bf16.msra.mxu0 0
        %273 = vmatprep.subr.bf16.mxu0 0
        %274 = vmatpush1.bf16.msra.mxu0 0
        %275 = vmatprep.subr.bf16.mxu0 0
        %276 = vmatpush1.bf16.msra.mxu0 0
        %277 = vmatprep.subr.bf16.mxu0 0
        %278 = vmatpush1.bf16.msra.mxu0 %v258
        %279 = vmatprep.subr.bf16.mxu0 0
        %280 = vmatpush1.bf16.msra.mxu0 %v257
        %281 = vmatprep.subr.bf16.mxu0 0
        %282 = vmatpush2.bf16.msra.mxu0 0
        %283 = vmatprep.subr.bf16.mxu0 0
        %284 = vmatpush2.bf16.msra.mxu0 0
        %285 = vmatprep.subr.bf16.mxu0 0
        %286 = vmatpush2.bf16.msra.mxu0 0
        %287 = vmatprep.subr.bf16.mxu0 0
        %288 = vmatpush2.bf16.msra.mxu0 0
        %289 = vmatprep.subr.bf16.mxu0 0
        %290 = vmatpush2.bf16.msra.mxu0 0
        %291 = vmatprep.subr.bf16.mxu0 0
        %292 = vmatpush2.bf16.msra.mxu0 0
        %293 = vmatprep.subr.bf16.mxu0 0
        %294 = vmatpush2.bf16.msra.mxu0 0
        %295 = vmatprep.subr.bf16.mxu0 0
        %296 = vmatpush2.bf16.msra.mxu0 0
        %297 = vmatprep.mubr.bf16.mxu0 0
        %298 = vmatmul.mubr.bf16.gmra.mxu0 %v263
        %v299 = vpop.f32.mrf.mxu0
        %v300 = vadd.f32 0.0, %v299
        %v301 = vpop.f32.mrf.mxu0
        %v302 = vpop.f32.mrf.mxu0
        %v303 = vpop.f32.mrf.mxu0
        %304 = vdwg.mxu0
        %v305 = vpack.c.bf16 %v300, %v300
        %v306 = vlaneseq
        %v307 = vshrl.u32 %v306, 7
        %v308 = vlaneseq
        %v309 = vand.u32 %v308, 127
        %vm310 = vcmp.le.s32.totalorder %v309, %v307
        %312 = vrot.lane.b32.xlu0 %v305, 96
        %v313 = vpop.permute.xlu0 %312
        %vm314 = vcmask 64512
        %v316 = vsel %vm314, %v305, 0
        %v319 = vsel %vm314, %v313, 0
        %321 = vmatprep.subr.bf16.mxu0 0
        %322 = vmatpush1.bf16.xpose.msra.mxu0 0
        %323 = vmatprep.subr.bf16.mxu0 0
        %324 = vmatpush1.bf16.xpose.msra.mxu0 0
        %325 = vmatprep.subr.bf16.mxu0 0
        %326 = vmatpush1.bf16.xpose.msra.mxu0 0
        %327 = vmatprep.subr.bf16.mxu0 0
        %328 = vmatpush1.bf16.xpose.msra.mxu0 0
        %329 = vmatprep.subr.bf16.mxu0 0
        %330 = vmatpush1.bf16.xpose.msra.mxu0 0
        %331 = vmatprep.subr.bf16.mxu0 0
        %332 = vmatpush1.bf16.xpose.msra.mxu0 0
        %333 = vmatprep.subr.bf16.mxu0 0
        %334 = vmatpush1.bf16.xpose.msra.mxu0 0
        %335 = vmatprep.subr.bf16.mxu0 0
        %336 = vmatpush1.bf16.xpose.msra.mxu0 %v319
        %337 = vmatprep.subr.bf16.mxu0 0
        %338 = vmatpush2.bf16.xpose.msra.mxu0 0
        %339 = vmatprep.subr.bf16.mxu0 0
        %340 = vmatpush2.bf16.xpose.msra.mxu0 0
        %341 = vmatprep.subr.bf16.mxu0 0
        %342 = vmatpush2.bf16.xpose.msra.mxu0 0
        %343 = vmatprep.subr.bf16.mxu0 0
        %344 = vmatpush2.bf16.xpose.msra.mxu0 0
        %345 = vmatprep.subr.bf16.mxu0 0
        %346 = vmatpush2.bf16.xpose.msra.mxu0 0
        %347 = vmatprep.subr.bf16.mxu0 0
        %348 = vmatpush2.bf16.xpose.msra.mxu0 0
        %349 = vmatprep.subr.bf16.mxu0 0
        %350 = vmatpush2.bf16.xpose.msra.mxu0 0
        %351 = vmatprep.subr.bf16.mxu0 0
        %352 = vmatpush2.bf16.xpose.msra.mxu0 0
        %353 = vmatprep.mubr.bf16.mxu0 0
        %354 = vmatmul.mubr.bf16.gmra.mxu0 %v316
        %v355 = vpop.f32.mrf.mxu0
        %v356 = vadd.f32 0.0, %v355
        %v357 = vpop.f32.mrf.mxu0
        %v358 = vpop.f32.mrf.mxu0
        %v359 = vpop.f32.mrf.mxu0
        %360 = vdwg.mxu0
        %v361 = vsel %vm310, %v356, -inf
        %v362 = vsel %vm314, %v361, -inf
        %363 = vmax.xlane.f32.xlu0 %v362
        %v364 = vpop.xlane.xlu0 %363
        %v365 = vsub.f32 %v361, %v364
        %v366 = vmul.f32 %v365, 1.442695
        %v367 = vpow.pop %v366
        %v368 = vsel %vm314, %v367, 0.0
        %369 = vadd.xlane.f32.xlu0 %v368
        %v370 = vpop.xlane.xlu0 %369
        %v371 = vrcp.pop %v370
        %v372 = vmul.f32 %v367, %v371
        %v373 = vpack.c.bf16 %v372, %v372
        %374 = vrot.lane.b32.xlu0 %v305, 64
        %v375 = vpop.permute.xlu0 %374
        %v377 = vsel %vm314, %v373, 0
        %vm379 = vcmask 1043456
        %v381 = vsel %vm379, %v375, 0
        %383 = vmatprep.subr.bf16.mxu0 0
        %384 = vmatpush1.bf16.msra.mxu0 0
        %385 = vmatprep.subr.bf16.mxu0 0
        %386 = vmatpush1.bf16.msra.mxu0 0
        %387 = vmatprep.subr.bf16.mxu0 0
        %388 = vmatpush1.bf16.msra.mxu0 0
        %389 = vmatprep.subr.bf16.mxu0 0
        %390 = vmatpush1.bf16.msra.mxu0 0
        %391 = vmatprep.subr.bf16.mxu0 0
        %392 = vmatpush1.bf16.msra.mxu0 0
        %393 = vmatprep.subr.bf16.mxu0 0
        %394 = vmatpush1.bf16.msra.mxu0 0
        %395 = vmatprep.subr.bf16.mxu0 0
        %396 = vmatpush1.bf16.msra.mxu0 0
        %397 = vmatprep.subr.bf16.mxu0 0
        %398 = vmatpush1.bf16.msra.mxu0 %v381
        %399 = vmatprep.subr.bf16.mxu0 0
        %400 = vmatpush2.bf16.msra.mxu0 0
        %401 = vmatprep.subr.bf16.mxu0 0
        %402 = vmatpush2.bf16.msra.mxu0 0
        %403 = vmatprep.subr.bf16.mxu0 0
        %404 = vmatpush2.bf16.msra.mxu0 0
        %405 = vmatprep.subr.bf16.mxu0 0
        %406 = vmatpush2.bf16.msra.mxu0 0
        %407 = vmatprep.subr.bf16.mxu0 0
        %408 = vmatpush2.bf16.msra.mxu0 0
        %409 = vmatprep.subr.bf16.mxu0 0
        %410 = vmatpush2.bf16.msra.mxu0 0
        %411 = vmatprep.subr.bf16.mxu0 0
        %412 = vmatpush2.bf16.msra.mxu0 0
        %413 = vmatprep.subr.bf16.mxu0 0
        %414 = vmatpush2.bf16.msra.mxu0 0
        %415 = vmatprep.mubr.bf16.mxu0 0
        %416 = vmatmul.mubr.bf16.gmra.mxu0 %v377
        %v417 = vpop.f32.mrf.mxu0
        %v418 = vadd.f32 0.0, %v417
        %v419 = vpop.f32.mrf.mxu0
        %v420 = vpop.f32.mrf.mxu0
        %v421 = vpop.f32.mrf.mxu0
        %422 = vdwg.mxu0
        %v423 = vpack.c.bf16 %v418, %v418
        %vm424 = vcmask 60416
        %425 = vst.msk [vmem:[#allocation2] sm:$0xf] %vm424, %v423
        %426 = vrot.lane.b32.xlu0 %v305, 120
        %v427 = vpop.permute.xlu0 %426
        %428 = vrot.lane.b32.xlu0 %v305, 88
        %v429 = vpop.permute.xlu0 %428
        %v431 = vsel %vm314, %v427, 0
        %v434 = vsel %vm314, %v429, 0
        %436 = vmatprep.subr.bf16.mxu0 0
        %437 = vmatpush1.bf16.xpose.msra.mxu0 0
        %438 = vmatprep.subr.bf16.mxu0 0
        %439 = vmatpush1.bf16.xpose.msra.mxu0 0
        %440 = vmatprep.subr.bf16.mxu0 0
        %441 = vmatpush1.bf16.xpose.msra.mxu0 0
        %442 = vmatprep.subr.bf16.mxu0 0
        %443 = vmatpush1.bf16.xpose.msra.mxu0 0
        %444 = vmatprep.subr.bf16.mxu0 0
        %445 = vmatpush1.bf16.xpose.msra.mxu0 0
        %446 = vmatprep.subr.bf16.mxu0 0
        %447 = vmatpush1.bf16.xpose.msra.mxu0 0
        %448 = vmatprep.subr.bf16.mxu0 0
        %449 = vmatpush1.bf16.xpose.msra.mxu0 0
        %450 = vmatprep.subr.bf16.mxu0 0
        %451 = vmatpush1.bf16.xpose.msra.mxu0 %v434
        %452 = vmatprep.subr.bf16.mxu0 0
        %453 = vmatpush2.bf16.xpose.msra.mxu0 0
        %454 = vmatprep.subr.bf16.mxu0 0
        %455 = vmatpush2.bf16.xpose.msra.mxu0 0
        %456 = vmatprep.subr.bf16.mxu0 0
        %457 = vmatpush2.bf16.xpose.msra.mxu0 0
        %458 = vmatprep.subr.bf16.mxu0 0
        %459 = vmatpush2.bf16.xpose.msra.mxu0 0
        %460 = vmatprep.subr.bf16.mxu0 0
        %461 = vmatpush2.bf16.xpose.msra.mxu0 0
        %462 = vmatprep.subr.bf16.mxu0 0
        %463 = vmatpush2.bf16.xpose.msra.mxu0 0
        %464 = vmatprep.subr.bf16.mxu0 0
        %465 = vmatpush2.bf16.xpose.msra.mxu0 0
        %466 = vmatprep.subr.bf16.mxu0 0
        %467 = vmatpush2.bf16.xpose.msra.mxu0 0
        %468 = vmatprep.mubr.bf16.mxu0 0
        %469 = vmatmul.mubr.bf16.gmra.mxu0 %v431
        %v470 = vpop.f32.mrf.mxu0
        %v471 = vadd.f32 0.0, %v470
        %v472 = vpop.f32.mrf.mxu0
        %v473 = vpop.f32.mrf.mxu0
        %v474 = vpop.f32.mrf.mxu0
        %475 = vdwg.mxu0
        %v476 = vsel %vm310, %v471, -inf
        %v477 = vsel %vm314, %v476, -inf
        %478 = vmax.xlane.f32.xlu0 %v477
        %v479 = vpop.xlane.xlu0 %478
        %v480 = vsub.f32 %v476, %v479
        %v481 = vmul.f32 %v480, 1.442695
        %v482 = vpow.pop %v481
        %v483 = vsel %vm314, %v482, 0.0
        %484 = vadd.xlane.f32.xlu0 %v483
        %v485 = vpop.xlane.xlu0 %484
        %v486 = vrcp.pop %v485
        %v487 = vmul.f32 %v482, %v486
        %v488 = vpack.c.bf16 %v487, %v487
        %489 = vrot.lane.b32.xlu0 %v305, 56
        %v490 = vpop.permute.xlu0 %489
        %v492 = vsel %vm314, %v488, 0
        %v495 = vsel %vm379, %v490, 0
        %497 = vmatprep.subr.bf16.mxu0 0
        %498 = vmatpush1.bf16.msra.mxu0 0
        %499 = vmatprep.subr.bf16.mxu0 0
        %500 = vmatpush1.bf16.msra.mxu0 0
        %501 = vmatprep.subr.bf16.mxu0 0
        %502 = vmatpush1.bf16.msra.mxu0 0
        %503 = vmatprep.subr.bf16.mxu0 0
        %504 = vmatpush1.bf16.msra.mxu0 0
        %505 = vmatprep.subr.bf16.mxu0 0
        %506 = vmatpush1.bf16.msra.mxu0 0
        %507 = vmatprep.subr.bf16.mxu0 0
        %508 = vmatpush1.bf16.msra.mxu0 0
        %509 = vmatprep.subr.bf16.mxu0 0
        %510 = vmatpush1.bf16.msra.mxu0 0
        %511 = vmatprep.subr.bf16.mxu0 0
        %512 = vmatpush1.bf16.msra.mxu0 %v495
        %513 = vmatprep.subr.bf16.mxu0 0
        %514 = vmatpush2.bf16.msra.mxu0 0
        %515 = vmatprep.subr.bf16.mxu0 0
        %516 = vmatpush2.bf16.msra.mxu0 0
        %517 = vmatprep.subr.bf16.mxu0 0
        %518 = vmatpush2.bf16.msra.mxu0 0
        %519 = vmatprep.subr.bf16.mxu0 0
        %520 = vmatpush2.bf16.msra.mxu0 0
        %521 = vmatprep.subr.bf16.mxu0 0
        %522 = vmatpush2.bf16.msra.mxu0 0
        %523 = vmatprep.subr.bf16.mxu0 0
        %524 = vmatpush2.bf16.msra.mxu0 0
        %525 = vmatprep.subr.bf16.mxu0 0
        %526 = vmatpush2.bf16.msra.mxu0 0
        %527 = vmatprep.subr.bf16.mxu0 0
        %528 = vmatpush2.bf16.msra.mxu0 0
        %529 = vmatprep.mubr.bf16.mxu0 0
        %530 = vmatmul.mubr.bf16.gmra.mxu0 %v492
        %v531 = vpop.f32.mrf.mxu0
        %v532 = vadd.f32 0.0, %v531
        %v533 = vpop.f32.mrf.mxu0
        %v534 = vpop.f32.mrf.mxu0
        %v535 = vpop.f32.mrf.mxu0
        %536 = vdwg.mxu0
        %v537 = vpack.c.bf16 %v532, %v532
        %v539 = vunpack.c.l.b16 %v537
        %v540 = vpack.c.b16 %v539, %v539
        %541 = vrot.lane.b32.xlu0 %v540, 8
        %v542 = vpop.permute.xlu0 %541
        %vm544 = vcmask 126016
        %545 = vst.msk [vmem:[#allocation2] sm:$0xf] %vm544, %v542
        %546 = vrot.lane.b32.xlu0 %v305, 112
        %v547 = vpop.permute.xlu0 %546
        %548 = vrot.lane.b32.xlu0 %v305, 80
        %v549 = vpop.permute.xlu0 %548
        %v551 = vsel %vm314, %v547, 0
        %v554 = vsel %vm314, %v549, 0
        %556 = vmatprep.subr.bf16.mxu0 0
        %557 = vmatpush1.bf16.xpose.msra.mxu0 0
        %558 = vmatprep.subr.bf16.mxu0 0
        %559 = vmatpush1.bf16.xpose.msra.mxu0 0
        %560 = vmatprep.subr.bf16.mxu0 0
        %561 = vmatpush1.bf16.xpose.msra.mxu0 0
        %562 = vmatprep.subr.bf16.mxu0 0
        %563 = vmatpush1.bf16.xpose.msra.mxu0 0
        %564 = vmatprep.subr.bf16.mxu0 0
        %565 = vmatpush1.bf16.xpose.msra.mxu0 0
        %566 = vmatprep.subr.bf16.mxu0 0
        %567 = vmatpush1.bf16.xpose.msra.mxu0 0
        %568 = vmatprep.subr.bf16.mxu0 0
        %569 = vmatpush1.bf16.xpose.msra.mxu0 0
        %570 = vmatprep.subr.bf16.mxu0 0
        %571 = vmatpush1.bf16.xpose.msra.mxu0 %v554
        %572 = vmatprep.subr.bf16.mxu0 0
        %573 = vmatpush2.bf16.xpose.msra.mxu0 0
        %574 = vmatprep.subr.bf16.mxu0 0
        %575 = vmatpush2.bf16.xpose.msra.mxu0 0
        %576 = vmatprep.subr.bf16.mxu0 0
        %577 = vmatpush2.bf16.xpose.msra.mxu0 0
        %578 = vmatprep.subr.bf16.mxu0 0
        %579 = vmatpush2.bf16.xpose.msra.mxu0 0
        %580 = vmatprep.subr.bf16.mxu0 0
        %581 = vmatpush2.bf16.xpose.msra.mxu0 0
        %582 = vmatprep.subr.bf16.mxu0 0
        %583 = vmatpush2.bf16.xpose.msra.mxu0 0
        %584 = vmatprep.subr.bf16.mxu0 0
        %585 = vmatpush2.bf16.xpose.msra.mxu0 0
        %586 = vmatprep.subr.bf16.mxu0 0
        %587 = vmatpush2.bf16.xpose.msra.mxu0 0
        %588 = vmatprep.mubr.bf16.mxu0 0
        %589 = vmatmul.mubr.bf16.gmra.mxu0 %v551
        %v590 = vpop.f32.mrf.mxu0
        %v591 = vadd.f32 0.0, %v590
        %v592 = vpop.f32.mrf.mxu0
        %v593 = vpop.f32.mrf.mxu0
        %v594 = vpop.f32.mrf.mxu0
        %595 = vdwg.mxu0
        %v596 = vsel %vm310, %v591, -inf
        %v597 = vsel %vm314, %v596, -inf
        %598 = vmax.xlane.f32.xlu0 %v597
        %v599 = vpop.xlane.xlu0 %598
        %v600 = vsub.f32 %v596, %v599
        %v601 = vmul.f32 %v600, 1.442695
        %v602 = vpow.pop %v601
        %v603 = vsel %vm314, %v602, 0.0
        %604 = vadd.xlane.f32.xlu0 %v603
        %v605 = vpop.xlane.xlu0 %604
        %v606 = vrcp.pop %v605
        %v607 = vmul.f32 %v602, %v606
        %v608 = vpack.c.bf16 %v607, %v607
        %609 = vrot.lane.b32.xlu0 %v305, 48
        %v610 = vpop.permute.xlu0 %609
        %v612 = vsel %vm314, %v608, 0
        %v615 = vsel %vm379, %v610, 0
        %617 = vmatprep.subr.bf16.mxu0 0
        %618 = vmatpush1.bf16.msra.mxu0 0
        %619 = vmatprep.subr.bf16.mxu0 0
        %620 = vmatpush1.bf16.msra.mxu0 0
        %621 = vmatprep.subr.bf16.mxu0 0
        %622 = vmatpush1.bf16.msra.mxu0 0
        %623 = vmatprep.subr.bf16.mxu0 0
        %624 = vmatpush1.bf16.msra.mxu0 0
        %625 = vmatprep.subr.bf16.mxu0 0
        %626 = vmatpush1.bf16.msra.mxu0 0
        %627 = vmatprep.subr.bf16.mxu0 0
        %628 = vmatpush1.bf16.msra.mxu0 0
        %629 = vmatprep.subr.bf16.mxu0 0
        %630 = vmatpush1.bf16.msra.mxu0 0
        %631 = vmatprep.subr.bf16.mxu0 0
        %632 = vmatpush1.bf16.msra.mxu0 %v615
        %633 = vmatprep.subr.bf16.mxu0 0
        %634 = vmatpush2.bf16.msra.mxu0 0
        %635 = vmatprep.subr.bf16.mxu0 0
        %636 = vmatpush2.bf16.msra.mxu0 0
        %637 = vmatprep.subr.bf16.mxu0 0
        %638 = vmatpush2.bf16.msra.mxu0 0
        %639 = vmatprep.subr.bf16.mxu0 0
        %640 = vmatpush2.bf16.msra.mxu0 0
        %641 = vmatprep.subr.bf16.mxu0 0
        %642 = vmatpush2.bf16.msra.mxu0 0
        %643 = vmatprep.subr.bf16.mxu0 0
        %644 = vmatpush2.bf16.msra.mxu0 0
        %645 = vmatprep.subr.bf16.mxu0 0
        %646 = vmatpush2.bf16.msra.mxu0 0
        %647 = vmatprep.subr.bf16.mxu0 0
        %648 = vmatpush2.bf16.msra.mxu0 0
        %649 = vmatprep.mubr.bf16.mxu0 0
        %650 = vmatmul.mubr.bf16.gmra.mxu0 %v612
        %v651 = vpop.f32.mrf.mxu0
        %v652 = vadd.f32 0.0, %v651
        %v653 = vpop.f32.mrf.mxu0
        %v654 = vpop.f32.mrf.mxu0
        %v655 = vpop.f32.mrf.mxu0
        %656 = vdwg.mxu0
        %v657 = vpack.c.bf16 %v652, %v652
        %v659 = vunpack.c.l.b16 %v657
        %v660 = vpack.c.b16 %v659, %v659
        %661 = vrot.lane.b32.xlu0 %v660, 16
        %v662 = vpop.permute.xlu0 %661
        %vm664 = vcmask 191616
        %665 = vst.msk [vmem:[#allocation2] sm:$0xf] %vm664, %v662
        %666 = vrot.lane.b32.xlu0 %v305, 104
        %v667 = vpop.permute.xlu0 %666
        %668 = vrot.lane.b32.xlu0 %v305, 72
        %v669 = vpop.permute.xlu0 %668
        %v671 = vsel %vm314, %v667, 0
        %v674 = vsel %vm314, %v669, 0
        %676 = vmatprep.subr.bf16.mxu0 0
        %677 = vmatpush1.bf16.xpose.msra.mxu0 0
        %678 = vmatprep.subr.bf16.mxu0 0
        %679 = vmatpush1.bf16.xpose.msra.mxu0 0
        %680 = vmatprep.subr.bf16.mxu0 0
        %681 = vmatpush1.bf16.xpose.msra.mxu0 0
        %682 = vmatprep.subr.bf16.mxu0 0
        %683 = vmatpush1.bf16.xpose.msra.mxu0 0
        %684 = vmatprep.subr.bf16.mxu0 0
        %685 = vmatpush1.bf16.xpose.msra.mxu0 0
        %686 = vmatprep.subr.bf16.mxu0 0
        %687 = vmatpush1.bf16.xpose.msra.mxu0 0
        %688 = vmatprep.subr.bf16.mxu0 0
        %689 = vmatpush1.bf16.xpose.msra.mxu0 0
        %690 = vmatprep.subr.bf16.mxu0 0
        %691 = vmatpush1.bf16.xpose.msra.mxu0 %v674
        %692 = vmatprep.subr.bf16.mxu0 0
        %693 = vmatpush2.bf16.xpose.msra.mxu0 0
        %694 = vmatprep.subr.bf16.mxu0 0
        %695 = vmatpush2.bf16.xpose.msra.mxu0 0
        %696 = vmatprep.subr.bf16.mxu0 0
        %697 = vmatpush2.bf16.xpose.msra.mxu0 0
        %698 = vmatprep.subr.bf16.mxu0 0
        %699 = vmatpush2.bf16.xpose.msra.mxu0 0
        %700 = vmatprep.subr.bf16.mxu0 0
        %701 = vmatpush2.bf16.xpose.msra.mxu0 0
        %702 = vmatprep.subr.bf16.mxu0 0
        %703 = vmatpush2.bf16.xpose.msra.mxu0 0
        %704 = vmatprep.subr.bf16.mxu0 0
        %705 = vmatpush2.bf16.xpose.msra.mxu0 0
        %706 = vmatprep.subr.bf16.mxu0 0
        %707 = vmatpush2.bf16.xpose.msra.mxu0 0
        %708 = vmatprep.mubr.bf16.mxu0 0
        %709 = vmatmul.mubr.bf16.gmra.mxu0 %v671
        %v710 = vpop.f32.mrf.mxu0
        %v711 = vadd.f32 0.0, %v710
        %v712 = vpop.f32.mrf.mxu0
        %v713 = vpop.f32.mrf.mxu0
        %v714 = vpop.f32.mrf.mxu0
        %715 = vdwg.mxu0
        %v716 = vsel %vm310, %v711, -inf
        %v717 = vsel %vm314, %v716, -inf
        %718 = vmax.xlane.f32.xlu0 %v717
        %v719 = vpop.xlane.xlu0 %718
        %v720 = vsub.f32 %v716, %v719
        %v721 = vmul.f32 %v720, 1.442695
        %v722 = vpow.pop %v721
        %v723 = vsel %vm314, %v722, 0.0
        %724 = vadd.xlane.f32.xlu0 %v723
        %v725 = vpop.xlane.xlu0 %724
        %v726 = vrcp.pop %v725
        %v727 = vmul.f32 %v722, %v726
        %v728 = vpack.c.bf16 %v727, %v727
        %729 = vrot.lane.b32.xlu0 %v305, 40
        %v730 = vpop.permute.xlu0 %729
        %v732 = vsel %vm314, %v728, 0
        %v735 = vsel %vm379, %v730, 0
        %737 = vmatprep.subr.bf16.mxu0 0
        %738 = vmatpush1.bf16.msra.mxu0 0
        %739 = vmatprep.subr.bf16.mxu0 0
        %740 = vmatpush1.bf16.msra.mxu0 0
        %741 = vmatprep.subr.bf16.mxu0 0
        %742 = vmatpush1.bf16.msra.mxu0 0
        %743 = vmatprep.subr.bf16.mxu0 0
        %744 = vmatpush1.bf16.msra.mxu0 0
        %745 = vmatprep.subr.bf16.mxu0 0
        %746 = vmatpush1.bf16.msra.mxu0 0
        %747 = vmatprep.subr.bf16.mxu0 0
        %748 = vmatpush1.bf16.msra.mxu0 0
        %749 = vmatprep.subr.bf16.mxu0 0
        %750 = vmatpush1.bf16.msra.mxu0 0
        %751 = vmatprep.subr.bf16.mxu0 0
        %752 = vmatpush1.bf16.msra.mxu0 %v735
        %753 = vmatprep.subr.bf16.mxu0 0
        %754 = vmatpush2.bf16.msra.mxu0 0
        %755 = vmatprep.subr.bf16.mxu0 0
        %756 = vmatpush2.bf16.msra.mxu0 0
        %757 = vmatprep.subr.bf16.mxu0 0
        %758 = vmatpush2.bf16.msra.mxu0 0
        %759 = vmatprep.subr.bf16.mxu0 0
        %760 = vmatpush2.bf16.msra.mxu0 0
        %761 = vmatprep.subr.bf16.mxu0 0
        %762 = vmatpush2.bf16.msra.mxu0 0
        %763 = vmatprep.subr.bf16.mxu0 0
        %764 = vmatpush2.bf16.msra.mxu0 0
        %765 = vmatprep.subr.bf16.mxu0 0
        %766 = vmatpush2.bf16.msra.mxu0 0
        %767 = vmatprep.subr.bf16.mxu0 0
        %768 = vmatpush2.bf16.msra.mxu0 0
        %769 = vmatprep.mubr.bf16.mxu0 0
        %770 = vmatmul.mubr.bf16.gmra.mxu0 %v732
        %v771 = vpop.f32.mrf.mxu0
        %v772 = vadd.f32 0.0, %v771
        %v773 = vpop.f32.mrf.mxu0
        %v774 = vpop.f32.mrf.mxu0
        %v775 = vpop.f32.mrf.mxu0
        %776 = vdwg.mxu0
        %v777 = vpack.c.bf16 %v772, %v772
        %v779 = vunpack.c.l.b16 %v777
        %v780 = vpack.c.b16 %v779, %v779
        %781 = vrot.lane.b32.xlu0 %v780, 24
        %v782 = vpop.permute.xlu0 %781
        %vm784 = vcmask 257216
        %785 = vst.msk [vmem:[#allocation2] sm:$0xf] %vm784, %v782
        %v786 = vld [vmem:[#allocation2] sm:$0xf]
        %v787 = vld [vmem:[#allocation8] sm:$0xf]
        %v788 = vld [vmem:[#allocation8 + $0x4] sm:$0xf]
        %v789 = vld [vmem:[#allocation8 + $0x8] sm:$0xf]
        %v790 = vld [vmem:[#allocation8 + $0xc] sm:$0xf]
        %v791 = vld [vmem:[%s3] sm:$0x1]
        %v793 = vlaneseq
        %v794 = vshrl.u32 %v793, 7
        %v795 = vsub.s32 0, %v794
        %v796 = vrot.slane %v791, %v795
        %v802 = vunpack.c.l.b16 %v787
        %v803 = vunpack.c.l.b16 %v788
        %v804 = vunpack.c.l.b16 %v789
        %v805 = vunpack.c.l.b16 %v790
        %v806 = vpack.c.b16 %v803, %v802
        %v807 = vpack.c.b16 %v805, %v804
        %v811 = vsel %vm261, %v786, 0
        %813 = vmatprep.subr.bf16.mxu0 0
        %814 = vmatpush1.bf16.msra.mxu0 0
        %815 = vmatprep.subr.bf16.mxu0 0
        %816 = vmatpush1.bf16.msra.mxu0 0
        %817 = vmatprep.subr.bf16.mxu0 0
        %818 = vmatpush1.bf16.msra.mxu0 0
        %819 = vmatprep.subr.bf16.mxu0 0
        %820 = vmatpush1.bf16.msra.mxu0 0
        %821 = vmatprep.subr.bf16.mxu0 0
        %822 = vmatpush1.bf16.msra.mxu0 0
        %823 = vmatprep.subr.bf16.mxu0 0
        %824 = vmatpush1.bf16.msra.mxu0 0
        %825 = vmatprep.subr.bf16.mxu0 0
        %826 = vmatpush1.bf16.msra.mxu0 %v807
        %827 = vmatprep.subr.bf16.mxu0 0
        %828 = vmatpush1.bf16.msra.mxu0 %v806
        %829 = vmatprep.subr.bf16.mxu0 0
        %830 = vmatpush2.bf16.msra.mxu0 0
        %831 = vmatprep.subr.bf16.mxu0 0
        %832 = vmatpush2.bf16.msra.mxu0 0
        %833 = vmatprep.subr.bf16.mxu0 0
        %834 = vmatpush2.bf16.msra.mxu0 0
        %835 = vmatprep.subr.bf16.mxu0 0
        %836 = vmatpush2.bf16.msra.mxu0 0
        %837 = vmatprep.subr.bf16.mxu0 0
        %838 = vmatpush2.bf16.msra.mxu0 0
        %839 = vmatprep.subr.bf16.mxu0 0
        %840 = vmatpush2.bf16.msra.mxu0 0
        %841 = vmatprep.subr.bf16.mxu0 0
        %842 = vmatpush2.bf16.msra.mxu0 0
        %843 = vmatprep.subr.bf16.mxu0 0
        %844 = vmatpush2.bf16.msra.mxu0 0
        %845 = vmatprep.mubr.bf16.mxu0 0
        %846 = vmatmul.mubr.bf16.gmra.mxu0 %v811
        %v847 = vpop.f32.mrf.mxu0
        %v848 = vadd.f32 %v796, %v847
        %v849 = vpop.f32.mrf.mxu0
        %v850 = vpop.f32.mrf.mxu0
        %v851 = vpop.f32.mrf.mxu0
        %852 = vdwg.mxu0
        %853 = vst.msk [vmem:[%s241] sm:$0xff] %vm261, %v848
        %s854 = sand.u32 %s119, 1
        %s855 = scalar_lea.sflag [#allocation5], %s854
        %s856 = sand.u32 %s119, 1
        %s857 = smul.addr %s856, 8
        %s858 = scalar_lea.vmem [#allocation9], %s857
        // Predicated region
        $region49: #{tpu_custom_call.1} parent=35 // pred_check
          %p859 = pneg %p129
        $region50: #{tpu_custom_call.1} parent=35 // pred_check_branch
          %861 = sbr.rel (%p859) target = $region52
        $region51: #{tpu_custom_call.1} parent=35 // pred_region
          %s863 = ssub.s32 128, 128
          %864 = vsyncadd %s855, %s863
          %s865 = smul.addr %s22, 128
          %s866 = scalar_lea.hbm %s4, %s865
          %s868 = sshll.u32 %s858, 4
          %s869 = int_to_ptr.vmem [resolvable:$true] %s868
          %871 = dma.vmem_to_hbm [thread:$0]  %s869, 128, %s866, %s855
        $region52: #{tpu_custom_call.1} parent=35 // pred_fallthru
          _
      $region36: #{tpu_custom_call.1} parent=5 // pred_fallthru
        _
      %p872 = scmp.le.s32.totalorder 2, %s17
      // Predicated region
      $region53: #{tpu_custom_call.1} parent=5 // pred_check
        %p873 = pneg %p872
      $region54: #{tpu_custom_call.1} parent=5 // pred_check_branch
        %875 = sbr.rel (%p873) target = $region56
      $region55: #{tpu_custom_call.1} parent=5 // pred_region
        %s876 = ssub.s32 %s17, 2
        // Predicated region
        $region57: #{tpu_custom_call.1} parent=55 // pred_check
          %p877 = pneg %p135
        $region58: #{tpu_custom_call.1} parent=55 // pred_check_branch
          %879 = sbr.rel (%p877) target = $region60
        $region59: #{tpu_custom_call.1} parent=55 // pred_region
          %s880 = sand.u32 %s120, 1
          %s881 = scalar_lea.sflag [#allocation5], %s880
          %s882 = sand.u32 %s120, 1
          %s883 = smul.addr %s882, 8
          %s884 = scalar_lea.vmem [#allocation9], %s883
          %885 = dma.done %s881, 128
        $region60: #{tpu_custom_call.1} parent=55 // pred_fallthru
          _
      $region56: #{tpu_custom_call.1} parent=5 // pred_fallthru
        _
    $region6: #{tpu_custom_call.1} parent=1 // loop_footer
      %s21 = sadd.s32 1, %s17
    $region7: #{tpu_custom_call.1} parent=1 // loop_footer_branch
      %16 = sbr.rel target = $region3
    $region8: #{tpu_custom_call.1} parent=1 // loop_exit
      _
    %886 = vsyncpa [#allocation4], 1
    %s887 = scalar_lea.sflag [#allocation4], 1
    %888 = vsyncpa %s887, 1
    %889 = vsyncpa [#allocation7], 1
    %890 = vsyncpa [#allocation5], 1
    %s891 = scalar_lea.sflag [#allocation5], 1
    %892 = vsyncpa %s891, 1

</llo_original>
